<compile_context>
chip_gen: v7x
topology: tpu7x:2x2x1
jax: 0.10.0
libtpu: 0.0.40
codegen_flags: <defaults>
</compile_context>

<pallas_src>
import math
import functools

import jax
import jax.numpy as jnp
from jax.experimental import pallas as pl
from jax.experimental.pallas import tpu as pltpu


def _pick_tile(dim, target, align):
    """Largest tile <= target that divides `dim` and is `align`-aligned; else full dim."""
    if dim <= target:
        return dim
    t = (target // align) * align
    while t >= align:
        if dim % t == 0:
            return t
        t -= align
    return dim


# ----------------------- fused (stacked) Q/K/V projection -----------------------
def _qkv_proj_kernel(x_ref, w_ref, b_ref, o_ref):
    # x: (1, tm, Din) bf16, w: (1, Din, D) bf16, b: (1, 1, D) f32, o: (1, tm, D) bf16
    acc = jnp.dot(x_ref[0], w_ref[0], preferred_element_type=jnp.float32) + b_ref[0]
    o_ref[0] = acc.astype(o_ref.dtype)


def qkv_projection(Q, K, V, w_q, b_q, w_k, b_k, w_v, b_v, *, tm_target=512):
    """Project Q/K/V with one pallas_call. Returns (3, B, S, D) bf16 (0=q, 1=k, 2=v)."""
    B, S, D = Q.shape
    M = B * S
    x = jnp.stack([Q.reshape(M, D), K.reshape(M, D), V.reshape(M, D)]).astype(jnp.bfloat16)
    # PyTorch (out, in) weight layout -> (in, out) so the kernel computes x @ W.
    w = jnp.stack([w_q.T, w_k.T, w_v.T]).astype(jnp.bfloat16)          # (3, Din, D)
    b = jnp.stack([b_q, b_k, b_v]).reshape(3, 1, D).astype(jnp.float32)
    tm = _pick_tile(M, tm_target, 8)
    qkv = pl.pallas_call(
        _qkv_proj_kernel,
        out_shape=jax.ShapeDtypeStruct((3, M, D), jnp.bfloat16),
        grid=(3, M // tm),
        in_specs=[
            pl.BlockSpec((1, tm, D), lambda p, i: (p, i, 0)),
            pl.BlockSpec((1, D, D), lambda p, i: (p, 0, 0)),
            pl.BlockSpec((1, 1, D), lambda p, i: (p, 0, 0)),
        ],
        out_specs=pl.BlockSpec((1, tm, D), lambda p, i: (p, i, 0)),
        compiler_params=pltpu.CompilerParams(
            dimension_semantics=("parallel", "parallel")),
    )(x, w, b)
    return qkv.reshape(3, B, S, D)


# ----------------------------- generic tiled linear -----------------------------
def _linear_kernel(x_ref, w_ref, b_ref, o_ref):
    acc = jnp.dot(x_ref[...], w_ref[...], preferred_element_type=jnp.float32)
    o_ref[...] = (acc + b_ref[...]).astype(o_ref.dtype)


def linear(x, w, b, *, out_dtype=jnp.float32, tm_target=512, tn_target=512):
    """x: (M, Din); w: (Dout, Din) (PyTorch layout); b: (Dout,). -> (M, Dout)."""
    M, Din = x.shape
    Dout = w.shape[0]
    tm = _pick_tile(M, tm_target, 8)
    tn = _pick_tile(Dout, tn_target, 128)
    # TODO(synk): add a K-reduction grid axis + f32 VMEM accumulator for very large Din.
    return pl.pallas_call(
        _linear_kernel,
        out_shape=jax.ShapeDtypeStruct((M, Dout), out_dtype),
        grid=(M // tm, Dout // tn),
        in_specs=[
            pl.BlockSpec((tm, Din), lambda i, j: (i, 0)),
            pl.BlockSpec((Din, tn), lambda i, j: (0, j)),
            pl.BlockSpec((1, tn), lambda i, j: (0, j)),
        ],
        out_specs=pl.BlockSpec((tm, tn), lambda i, j: (i, j)),
        compiler_params=pltpu.CompilerParams(
            dimension_semantics=("parallel", "parallel")),
    )(x.astype(jnp.bfloat16), w.T.astype(jnp.bfloat16),
      b.reshape(1, Dout).astype(jnp.float32))


# ----------------------------- attention core kernel -----------------------------
def _attn_kernel(q_ref, k_ref, v_ref, keep_ref, biasm_ref, o_ref, s_ref,
                 *, num_heads, dim_qkv, inv_scale):
    q = q_ref[0, 0]        # (tq, D) bf16
    k = k_ref[0, 0]        # (S,  D) bf16
    v = v_ref[0, 0]        # (S,  D) bf16
    keep = keep_ref[0]     # (tq, S) f32: 1.0 keep, 0.0 masked
    biasm = biasm_ref[0]   # (tq, S) f32: rel-bias where kept, exactly -1e9 where masked

    outs = []
    for h in range(num_heads):             # static unroll; head split = lane slices
        lo = h * dim_qkv
        hi = lo + dim_qkv
        q_h = q[:, lo:hi]
        k_h = k[:, lo:hi]
        v_h = v[:, lo:hi]
        # Q K^T without materializing k.T: contract the last dims of both operands.
        raw = jax.lax.dot_general(q_h, k_h, (((1,), (1,)), ((), ())),
                                  preferred_element_type=jnp.float32)      # (tq, S)
        # raw/scale + bias with masked_fill(mask==0, -1e9) semantics (exactly -1e9).
        scores = raw * inv_scale * keep + biasm
        s_ref[0, h] = scores                                              # lane-dense slab
        m = jnp.max(scores, axis=-1, keepdims=True)
        p = jnp.exp(scores - m)
        p = p * pl.reciprocal(jnp.sum(p, axis=-1, keepdims=True), approx=True)
        # TODO(synk): dropout on attention probabilities omitted (eval / identity).
        out_h = jax.lax.dot_general(p.astype(v_h.dtype), v_h,
                                    (((1,), (0,)), ((), ())),
                                    preferred_element_type=jnp.float32)    # (tq, dqk)
        outs.append(out_h)
    # Single lane-dense store of the whole (tq, D) tile.
    o_ref[0] = jnp.concatenate(outs, axis=-1).astype(o_ref.dtype)


def attention_core(qkv, keep, biasm, num_heads, *, tq_target=256):
    """qkv: (3, B, S, D) bf16; keep/biasm: (Bm, S, S) f32 with Bm in {1, B}.

    Returns (attn_out (B, S, D) bf16, attention_scores (B, H, S, S) f32).
    """
    _, B, S, D = qkv.shape
    H = num_heads
    dqk = D // H
    tq = _pick_tile(S, tq_target, 8)          # query tiling keeps VMEM ~ tq*S
    Bm = keep.shape[0]
    if Bm == 1:
        bidx = lambda b, qi: (0, qi, 0)
    else:
        bidx = lambda b, qi: (b, qi, 0)
    kernel = functools.partial(_attn_kernel, num_heads=H, dim_qkv=dqk,
                               inv_scale=1.0 / math.sqrt(dqk))
    out, scores = pl.pallas_call(
        kernel,
        out_shape=(jax.ShapeDtypeStruct((B, S, D), qkv.dtype),
                   jax.ShapeDtypeStruct((B, H, S, S), jnp.float32)),
        grid=(B, S // tq),
        in_specs=[
            pl.BlockSpec((1, 1, tq, D), lambda b, qi: (0, b, qi, 0)),   # Q tile
            pl.BlockSpec((1, 1, S, D), lambda b, qi: (1, b, 0, 0)),     # K (full seq)
            pl.BlockSpec((1, 1, S, D), lambda b, qi: (2, b, 0, 0)),     # V (full seq)
            pl.BlockSpec((1, tq, S), bidx),                             # keep mask
            pl.BlockSpec((1, tq, S), bidx),                             # masked bias
        ],
        out_specs=(
            pl.BlockSpec((1, tq, D), lambda b, qi: (b, qi, 0)),
            pl.BlockSpec((1, H, tq, S), lambda b, qi: (b, 0, qi, 0)),
        ),
        compiler_params=pltpu.CompilerParams(
            dimension_semantics=("parallel", "parallel")),
    )(qkv, qkv, qkv, keep, biasm)
    return out, scores


# ----------------------------- params / forward -----------------------------
def init_params(key, d_model, max_relative_position=16):
    """Deterministic init matching the PyTorch module's __init__ shapes."""
    ks = jax.random.split(key, 9)
    xavier_bound = math.sqrt(6.0 / (d_model + d_model))
    bias_bound = 1.0 / math.sqrt(d_model)  # PyTorch Linear default bias init

    def lin(kw, kb):
        w = jax.random.uniform(kw, (d_model, d_model), jnp.float32,
                               -xavier_bound, xavier_bound)
        b = jax.random.uniform(kb, (d_model,), jnp.float32,
                               -bias_bound, bias_bound)
        return w, b

    w_q, b_q = lin(ks[0], ks[1])
    w_k, b_k = lin(ks[2], ks[3])
    w_v, b_v = lin(ks[4], ks[5])
    w_o, b_o = lin(ks[6], ks[7])
    rel_vocab = 2 * max_relative_position + 1
    rel_bias = jax.random.uniform(ks[8], (rel_vocab, 1), jnp.float32, -0.05, 0.05)
    return dict(w_q=w_q, b_q=b_q, w_k=w_k, b_k=b_k, w_v=w_v, b_v=b_v,
                w_o=w_o, b_o=b_o, rel_bias=rel_bias)


def mha_relb_forward(params, Q, K, V, relative_ids, mask, num_heads):
    """Matches MultiHeadAttention_relB.forward: returns (output, attention_scores)."""
    B, S, D = Q.shape
    # TODO(synk): cross-attention with K/V sequence length != Q would need
    # separate projection calls; the fused stacked projection assumes equal shapes.
    assert K.shape == Q.shape and V.shape == Q.shape

    qkv = qkv_projection(Q, K, V,
                         params["w_q"], params["b_q"],
                         params["w_k"], params["b_k"],
                         params["w_v"], params["b_v"])          # (3, B, S, D) bf16

    # Relative-bias embedding lookup (tiny plain-JAX gather) + mask folded into two
    # multiplicative/additive f32 operands outside the kernel.
    bias = params["rel_bias"][relative_ids][..., 0].astype(jnp.float32)   # (S, S)
    if mask is None:
        keep = jnp.ones((1, S, S), jnp.float32)
        biasm = bias[None]
    else:
        m = mask
        if m.ndim == 4:                      # (B, 1, S, S) -> (B, S, S)
            m = m.reshape(m.shape[0], S, S)
        elif m.ndim == 2:                    # (S, S) -> shared across batch
            m = m[None]
        m = (m != 0)
        keep = m.astype(jnp.float32)
        biasm = jnp.where(m, bias[None], jnp.float32(-1.0e9))

    attn_out, scores = attention_core(qkv, keep, biasm, num_heads)

    output = linear(attn_out.reshape(B * S, D), params["w_o"], params["b_o"],
                    out_dtype=jnp.float32).reshape(B, S, D)
    return output, scores


if __name__ == "__main__":
    d_model = 32
    num_heads = 4
    batch = 2
    seq = 8
    max_rel = 16

    key = jax.random.PRNGKey(0)
    kp, kq, kk, kv = jax.random.split(key, 4)
    params = init_params(kp, d_model, max_rel)

    Q = jax.random.normal(kq, (batch, seq, d_model), jnp.float32)
    K = jax.random.normal(kk, (batch, seq, d_model), jnp.float32)
    V = jax.random.normal(kv, (batch, seq, d_model), jnp.float32)

    # relative_ids[i, j] = clip(j - i, -16, 16) + 16
    pos = jnp.arange(seq)
    relative_ids = jnp.clip(pos[None, :] - pos[:, None], -max_rel, max_rel) + max_rel
    relative_ids = relative_ids.astype(jnp.int32)

    # causal mask (1 = keep, 0 = masked)
    mask = (pos[None, :] <= pos[:, None]).astype(jnp.int32)

    fwd = jax.jit(mha_relb_forward, static_argnums=(6,))
    output, attention_scores = fwd(params, Q, K, V, relative_ids, mask, num_heads)
    jax.block_until_ready(output)
    jax.block_until_ready(attention_scores)

    assert output.shape == (batch, seq, d_model)
    assert attention_scores.shape == (batch, num_heads, seq, seq)
    print("KERNEL_OK")
</pallas_src>

<mosaic_0001>
module attributes {stable_mosaic.version = 11 : i64} {
  func.func @_qkv_proj_kernel(%arg0: i32, %arg1: i32, %arg2: memref<1x16x32xbf16, #tpu.memory_space<vmem>>, %arg3: memref<1x32x32xbf16, #tpu.memory_space<vmem>>, %arg4: memref<1x1x32xf32, #tpu.memory_space<vmem>>, %arg5: memref<1x16x32xbf16, #tpu.memory_space<vmem>>) attributes {dimension_semantics = [#tpu.dimension_semantics<parallel>, #tpu.dimension_semantics<parallel>], iteration_bounds = array<i64: 3, 1>, scalar_prefetch = 0 : i64, scratch_operands = 0 : i64, tpu.core_type = #tpu.core_type<tc>, window_params = [{transform_indices = @transform_0, window_bounds = array<i64: 1, 16, 32>}, {transform_indices = @transform_1, window_bounds = array<i64: 1, 32, 32>}, {transform_indices = @transform_2, window_bounds = array<i64: 1, 1, 32>}, {transform_indices = @transform_3, window_bounds = array<i64: 1, 16, 32>}]} {
    %c0 = arith.constant 0 : index
    %c0_0 = arith.constant 0 : index
    %c0_1 = arith.constant 0 : index
    %0 = vector.load %arg2[%c0, %c0_0, %c0_1] : memref<1x16x32xbf16, #tpu.memory_space<vmem>>, vector<1x16x32xbf16>
    %1 = vector.shape_cast %0 : vector<1x16x32xbf16> to vector<16x32xbf16>
    %c0_2 = arith.constant 0 : index
    %c0_3 = arith.constant 0 : index
    %c0_4 = arith.constant 0 : index
    %2 = vector.load %arg3[%c0_2, %c0_3, %c0_4] : memref<1x32x32xbf16, #tpu.memory_space<vmem>>, vector<1x32x32xbf16>
    %3 = vector.shape_cast %2 : vector<1x32x32xbf16> to vector<32x32xbf16>
    %cst = arith.constant dense<0.000000e+00> : vector<16x32xf32>
    %4 = tpu.matmul %1, %3, %cst {dimension_numbers = #tpu.dot_dimension_numbers<[1], [0], [0], [1], [0, 0, 1, 1], [], []>} : vector<16x32xbf16>, vector<32x32xbf16>, vector<16x32xf32> -> vector<16x32xf32>
    %c0_5 = arith.constant 0 : index
    %c0_6 = arith.constant 0 : index
    %c0_7 = arith.constant 0 : index
    %5 = vector.load %arg4[%c0_5, %c0_6, %c0_7] : memref<1x1x32xf32, #tpu.memory_space<vmem>>, vector<1x1x32xf32>
    %6 = vector.shape_cast %5 : vector<1x1x32xf32> to vector<1x32xf32>
    %7 = vector.broadcast %6 : vector<1x32xf32> to vector<16x32xf32>
    %8 = arith.addf %4, %7 : vector<16x32xf32>
    %9 = arith.truncf %8 : vector<16x32xf32> to vector<16x32xbf16>
    %c0_8 = arith.constant 0 : index
    %c0_9 = arith.constant 0 : index
    %c0_10 = arith.constant 0 : index
    %10 = vector.load %arg5[%c0_8, %c0_9, %c0_10] : memref<1x16x32xbf16, #tpu.memory_space<vmem>>, vector<1x16x32xbf16>
    %11 = vector.shape_cast %10 : vector<1x16x32xbf16> to vector<16x32xbf16>
    %12 = vector.shape_cast %9 : vector<16x32xbf16> to vector<1x16x32xbf16>
    tpu.vector_store %arg5[%c0_8, %c0_9, %c0_10], %12 {strides = array<i32>} : memref<1x16x32xbf16, #tpu.memory_space<vmem>>, vector<1x16x32xbf16>,
    return
  }
  func.func @transform_0(%arg0: i32, %arg1: i32) -> (i32, i32, i32) {
    %c0_i32 = arith.constant 0 : i32
    %c0_i32_0 = arith.constant 0 : i32
    return %arg0, %arg1, %c0_i32 : i32, i32, i32
  }
  func.func @transform_1(%arg0: i32, %arg1: i32) -> (i32, i32, i32) {
    %c0_i32 = arith.constant 0 : i32
    %c0_i32_0 = arith.constant 0 : i32
    %c0_i32_1 = arith.constant 0 : i32
    return %arg0, %c0_i32, %c0_i32_0 : i32, i32, i32
  }
  func.func @transform_2(%arg0: i32, %arg1: i32) -> (i32, i32, i32) {
    %c0_i32 = arith.constant 0 : i32
    %c0_i32_0 = arith.constant 0 : i32
    %c0_i32_1 = arith.constant 0 : i32
    return %arg0, %c0_i32, %c0_i32_0 : i32, i32, i32
  }
  func.func @transform_3(%arg0: i32, %arg1: i32) -> (i32, i32, i32) {
    %c0_i32 = arith.constant 0 : i32
    %c0_i32_0 = arith.constant 0 : i32
    return %arg0, %arg1, %c0_i32 : i32, i32, i32
  }
}

module attributes {stable_mosaic.version = 11 : i64} {
  func.func @_linear_kernel(%arg0: i32, %arg1: i32, %arg2: memref<16x32xbf16, #tpu.memory_space<vmem>>, %arg3: memref<32x32xbf16, #tpu.memory_space<vmem>>, %arg4: memref<1x32xf32, #tpu.memory_space<vmem>>, %arg5: memref<16x32xf32, #tpu.memory_space<vmem>>) attributes {dimension_semantics = [#tpu.dimension_semantics<parallel>, #tpu.dimension_semantics<parallel>], iteration_bounds = array<i64: 1, 1>, scalar_prefetch = 0 : i64, scratch_operands = 0 : i64, tpu.core_type = #tpu.core_type<tc>, window_params = [{transform_indices = @transform_0, window_bounds = array<i64: 16, 32>}, {transform_indices = @transform_1, window_bounds = array<i64: 32, 32>}, {transform_indices = @transform_2, window_bounds = array<i64: 1, 32>}, {transform_indices = @transform_3, window_bounds = array<i64: 16, 32>}]} {
    %c0 = arith.constant 0 : index
    %c0_0 = arith.constant 0 : index
    %0 = vector.load %arg2[%c0, %c0_0] : memref<16x32xbf16, #tpu.memory_space<vmem>>, vector<16x32xbf16>
    %c0_1 = arith.constant 0 : index
    %c0_2 = arith.constant 0 : index
    %1 = vector.load %arg3[%c0_1, %c0_2] : memref<32x32xbf16, #tpu.memory_space<vmem>>, vector<32x32xbf16>
    %cst = arith.constant dense<0.000000e+00> : vector<16x32xf32>
    %2 = tpu.matmul %0, %1, %cst {dimension_numbers = #tpu.dot_dimension_numbers<[1], [0], [0], [1], [0, 0, 1, 1], [], []>} : vector<16x32xbf16>, vector<32x32xbf16>, vector<16x32xf32> -> vector<16x32xf32>
    %c0_3 = arith.constant 0 : index
    %c0_4 = arith.constant 0 : index
    %3 = vector.load %arg4[%c0_3, %c0_4] : memref<1x32xf32, #tpu.memory_space<vmem>>, vector<1x32xf32>
    %4 = vector.broadcast %3 : vector<1x32xf32> to vector<16x32xf32>
    %5 = arith.addf %2, %4 : vector<16x32xf32>
    %c0_5 = arith.constant 0 : index
    %c0_6 = arith.constant 0 : index
    %6 = vector.load %arg5[%c0_5, %c0_6] : memref<16x32xf32, #tpu.memory_space<vmem>>, vector<16x32xf32>
    tpu.vector_store %arg5[%c0_5, %c0_6], %5 {strides = array<i32>} : memref<16x32xf32, #tpu.memory_space<vmem>>, vector<16x32xf32>,
    return
  }
  func.func @transform_0(%arg0: i32, %arg1: i32) -> (i32, i32) {
    %c0_i32 = arith.constant 0 : i32
    %c0_i32_0 = arith.constant 0 : i32
    return %arg0, %c0_i32 : i32, i32
  }
  func.func @transform_1(%arg0: i32, %arg1: i32) -> (i32, i32) {
    %c0_i32 = arith.constant 0 : i32
    %c0_i32_0 = arith.constant 0 : i32
    return %c0_i32, %arg1 : i32, i32
  }
  func.func @transform_2(%arg0: i32, %arg1: i32) -> (i32, i32) {
    %c0_i32 = arith.constant 0 : i32
    %c0_i32_0 = arith.constant 0 : i32
    return %c0_i32, %arg1 : i32, i32
  }
  func.func @transform_3(%arg0: i32, %arg1: i32) -> (i32, i32) {
    %c0_i32 = arith.constant 0 : i32
    return %arg0, %arg1 : i32, i32
  }
}

module attributes {stable_mosaic.version = 11 : i64} {
  func.func @_attn_kernel(%arg0: i32, %arg1: i32, %arg2: memref<1x1x8x32xbf16, #tpu.memory_space<vmem>>, %arg3: memref<1x1x8x32xbf16, #tpu.memory_space<vmem>>, %arg4: memref<1x1x8x32xbf16, #tpu.memory_space<vmem>>, %arg5: memref<1x8x8xf32, #tpu.memory_space<vmem>>, %arg6: memref<1x8x8xf32, #tpu.memory_space<vmem>>, %arg7: memref<1x8x32xbf16, #tpu.memory_space<vmem>>, %arg8: memref<1x4x8x8xf32, #tpu.memory_space<vmem>>) attributes {dimension_semantics = [#tpu.dimension_semantics<parallel>, #tpu.dimension_semantics<parallel>], iteration_bounds = array<i64: 2, 1>, scalar_prefetch = 0 : i64, scratch_operands = 0 : i64, tpu.core_type = #tpu.core_type<tc>, window_params = [{transform_indices = @transform_0, window_bounds = array<i64: 1, 1, 8, 32>}, {transform_indices = @transform_1, window_bounds = array<i64: 1, 1, 8, 32>}, {transform_indices = @transform_2, window_bounds = array<i64: 1, 1, 8, 32>}, {transform_indices = @transform_3, window_bounds = array<i64: 1, 8, 8>}, {transform_indices = @transform_4, window_bounds = array<i64: 1, 8, 8>}, {transform_indices = @transform_5, window_bounds = array<i64: 1, 8, 32>}, {transform_indices = @transform_6, window_bounds = array<i64: 1, 4, 8, 8>}]} {
    %c0 = arith.constant 0 : index
    %c0_0 = arith.constant 0 : index
    %c0_1 = arith.constant 0 : index
    %c0_2 = arith.constant 0 : index
    %0 = vector.load %arg2[%c0, %c0_0, %c0_1, %c0_2] : memref<1x1x8x32xbf16, #tpu.memory_space<vmem>>, vector<1x1x8x32xbf16>
    %1 = vector.shape_cast %0 : vector<1x1x8x32xbf16> to vector<8x32xbf16>
    %c0_3 = arith.constant 0 : index
    %c0_4 = arith.constant 0 : index
    %c0_5 = arith.constant 0 : index
    %c0_6 = arith.constant 0 : index
    %2 = vector.load %arg3[%c0_3, %c0_4, %c0_5, %c0_6] : memref<1x1x8x32xbf16, #tpu.memory_space<vmem>>, vector<1x1x8x32xbf16>
    %3 = vector.shape_cast %2 : vector<1x1x8x32xbf16> to vector<8x32xbf16>
    %c0_7 = arith.constant 0 : index
    %c0_8 = arith.constant 0 : index
    %c0_9 = arith.constant 0 : index
    %c0_10 = arith.constant 0 : index
    %4 = vector.load %arg4[%c0_7, %c0_8, %c0_9, %c0_10] : memref<1x1x8x32xbf16, #tpu.memory_space<vmem>>, vector<1x1x8x32xbf16>
    %5 = vector.shape_cast %4 : vector<1x1x8x32xbf16> to vector<8x32xbf16>
    %c0_11 = arith.constant 0 : index
    %c0_12 = arith.constant 0 : index
    %c0_13 = arith.constant 0 : index
    %6 = vector.load %arg5[%c0_11, %c0_12, %c0_13] : memref<1x8x8xf32, #tpu.memory_space<vmem>>, vector<1x8x8xf32>
    %7 = vector.shape_cast %6 : vector<1x8x8xf32> to vector<8x8xf32>
    %c0_14 = arith.constant 0 : index
    %c0_15 = arith.constant 0 : index
    %c0_16 = arith.constant 0 : index
    %8 = vector.load %arg6[%c0_14, %c0_15, %c0_16] : memref<1x8x8xf32, #tpu.memory_space<vmem>>, vector<1x8x8xf32>
    %9 = vector.shape_cast %8 : vector<1x8x8xf32> to vector<8x8xf32>
    %10 = vector.extract_strided_slice %1 {offsets = [0, 0], sizes = [8, 8], strides = [1, 1]} : vector<8x32xbf16> to vector<8x8xbf16>
    %11 = vector.extract_strided_slice %3 {offsets = [0, 0], sizes = [8, 8], strides = [1, 1]} : vector<8x32xbf16> to vector<8x8xbf16>
    %12 = vector.extract_strided_slice %5 {offsets = [0, 0], sizes = [8, 8], strides = [1, 1]} : vector<8x32xbf16> to vector<8x8xbf16>
    %cst = arith.constant dense<0.000000e+00> : vector<8x8xf32>
    %13 = tpu.matmul %10, %11, %cst {dimension_numbers = #tpu.dot_dimension_numbers<[1], [1], [0], [0], [0, 0, 1, 0], [], []>} : vector<8x8xbf16>, vector<8x8xbf16>, vector<8x8xf32> -> vector<8x8xf32>
    %cst_17 = arith.constant 0.353553385 : f32
    %14 = vector.broadcast %cst_17 : f32 to vector<8x8xf32>
    %15 = arith.mulf %13, %14 : vector<8x8xf32>
    %16 = arith.mulf %15, %7 : vector<8x8xf32>
    %17 = arith.addf %16, %9 : vector<8x8xf32>
    %c0_18 = arith.constant 0 : index
    %c0_19 = arith.constant 0 : index
    %c0_20 = arith.constant 0 : index
    %c0_21 = arith.constant 0 : index
    %18 = vector.load %arg8[%c0_18, %c0_19, %c0_20, %c0_21] : memref<1x4x8x8xf32, #tpu.memory_space<vmem>>, vector<1x1x8x8xf32>
    %19 = vector.shape_cast %18 : vector<1x1x8x8xf32> to vector<8x8xf32>
    %20 = vector.shape_cast %17 : vector<8x8xf32> to vector<1x1x8x8xf32>
    tpu.vector_store %arg8[%c0_18, %c0_19, %c0_20, %c0_21], %20 {strides = array<i32>} : memref<1x4x8x8xf32, #tpu.memory_space<vmem>>, vector<1x1x8x8xf32>,
    %cst_22 = arith.constant dense<0xFF800000> : vector<8xf32>
    %21 = vector.multi_reduction <maximumf>, %17, %cst_22 [1] : vector<8x8xf32> to vector<8xf32>
    %22 = vector.shape_cast %21 : vector<8xf32> to vector<8x1xf32>
    %23 = vector.broadcast %22 : vector<8x1xf32> to vector<8x8xf32>
    %24 = arith.subf %17, %23 : vector<8x8xf32>
    %25 = math.exp %24 : vector<8x8xf32>
    %cst_23 = arith.constant dense<0.000000e+00> : vector<8xf32>
    %26 = vector.multi_reduction <add>, %25, %cst_23 [1] : vector<8x8xf32> to vector<8xf32>
    %27 = vector.shape_cast %26 : vector<8xf32> to vector<8x1xf32>
    %28 = tpu.reciprocal %27 {approx = true} : vector<8x1xf32> -> vector<8x1xf32>
    %29 = vector.broadcast %28 : vector<8x1xf32> to vector<8x8xf32>
    %30 = arith.mulf %25, %29 : vector<8x8xf32>
    %31 = arith.truncf %30 : vector<8x8xf32> to vector<8x8xbf16>
    %cst_24 = arith.constant dense<0.000000e+00> : vector<8x8xf32>
    %32 = tpu.matmul %31, %12, %cst_24 {dimension_numbers = #tpu.dot_dimension_numbers<[1], [0], [0], [1], [0, 0, 1, 1], [], []>} : vector<8x8xbf16>, vector<8x8xbf16>, vector<8x8xf32> -> vector<8x8xf32>
    %33 = vector.extract_strided_slice %1 {offsets = [0, 8], sizes = [8, 8], strides = [1, 1]} : vector<8x32xbf16> to vector<8x8xbf16>
    %34 = vector.extract_strided_slice %3 {offsets = [0, 8], sizes = [8, 8], strides = [1, 1]} : vector<8x32xbf16> to vector<8x8xbf16>
    %35 = vector.extract_strided_slice %5 {offsets = [0, 8], sizes = [8, 8], strides = [1, 1]} : vector<8x32xbf16> to vector<8x8xbf16>
    %cst_25 = arith.constant dense<0.000000e+00> : vector<8x8xf32>
    %36 = tpu.matmul %33, %34, %cst_25 {dimension_numbers = #tpu.dot_dimension_numbers<[1], [1], [0], [0], [0, 0, 1, 0], [], []>} : vector<8x8xbf16>, vector<8x8xbf16>, vector<8x8xf32> -> vector<8x8xf32>
    %cst_26 = arith.constant 0.353553385 : f32
    %37 = vector.broadcast %cst_26 : f32 to vector<8x8xf32>
    %38 = arith.mulf %36, %37 : vector<8x8xf32>
    %39 = arith.mulf %38, %7 : vector<8x8xf32>
    %40 = arith.addf %39, %9 : vector<8x8xf32>
    %c0_27 = arith.constant 0 : index
    %c1 = arith.constant 1 : index
    %c0_28 = arith.constant 0 : index
    %c0_29 = arith.constant 0 : index
    %41 = vector.load %arg8[%c0_27, %c1, %c0_28, %c0_29] : memref<1x4x8x8xf32, #tpu.memory_space<vmem>>, vector<1x1x8x8xf32>
    %42 = vector.shape_cast %41 : vector<1x1x8x8xf32> to vector<8x8xf32>
    %43 = vector.shape_cast %40 : vector<8x8xf32> to vector<1x1x8x8xf32>
    tpu.vector_store %arg8[%c0_27, %c1, %c0_28, %c0_29], %43 {strides = array<i32>} : memref<1x4x8x8xf32, #tpu.memory_space<vmem>>, vector<1x1x8x8xf32>,
    %cst_30 = arith.constant dense<0xFF800000> : vector<8xf32>
    %44 = vector.multi_reduction <maximumf>, %40, %cst_30 [1] : vector<8x8xf32> to vector<8xf32>
    %45 = vector.shape_cast %44 : vector<8xf32> to vector<8x1xf32>
    %46 = vector.broadcast %45 : vector<8x1xf32> to vector<8x8xf32>
    %47 = arith.subf %40, %46 : vector<8x8xf32>
    %48 = math.exp %47 : vector<8x8xf32>
    %cst_31 = arith.constant dense<0.000000e+00> : vector<8xf32>
    %49 = vector.multi_reduction <add>, %48, %cst_31 [1] : vector<8x8xf32> to vector<8xf32>
    %50 = vector.shape_cast %49 : vector<8xf32> to vector<8x1xf32>
    %51 = tpu.reciprocal %50 {approx = true} : vector<8x1xf32> -> vector<8x1xf32>
    %52 = vector.broadcast %51 : vector<8x1xf32> to vector<8x8xf32>
    %53 = arith.mulf %48, %52 : vector<8x8xf32>
    %54 = arith.truncf %53 : vector<8x8xf32> to vector<8x8xbf16>
    %cst_32 = arith.constant dense<0.000000e+00> : vector<8x8xf32>
    %55 = tpu.matmul %54, %35, %cst_32 {dimension_numbers = #tpu.dot_dimension_numbers<[1], [0], [0], [1], [0, 0, 1, 1], [], []>} : vector<8x8xbf16>, vector<8x8xbf16>, vector<8x8xf32> -> vector<8x8xf32>
    %56 = vector.extract_strided_slice %1 {offsets = [0, 16], sizes = [8, 8], strides = [1, 1]} : vector<8x32xbf16> to vector<8x8xbf16>
    %57 = vector.extract_strided_slice %3 {offsets = [0, 16], sizes = [8, 8], strides = [1, 1]} : vector<8x32xbf16> to vector<8x8xbf16>
    %58 = vector.extract_strided_slice %5 {offsets = [0, 16], sizes = [8, 8], strides = [1, 1]} : vector<8x32xbf16> to vector<8x8xbf16>
    %cst_33 = arith.constant dense<0.000000e+00> : vector<8x8xf32>
    %59 = tpu.matmul %56, %57, %cst_33 {dimension_numbers = #tpu.dot_dimension_numbers<[1], [1], [0], [0], [0, 0, 1, 0], [], []>} : vector<8x8xbf16>, vector<8x8xbf16>, vector<8x8xf32> -> vector<8x8xf32>
    %cst_34 = arith.constant 0.353553385 : f32
    %60 = vector.broadcast %cst_34 : f32 to vector<8x8xf32>
    %61 = arith.mulf %59, %60 : vector<8x8xf32>
    %62 = arith.mulf %61, %7 : vector<8x8xf32>
    %63 = arith.addf %62, %9 : vector<8x8xf32>
    %c0_35 = arith.constant 0 : index
    %c2 = arith.constant 2 : index
    %c0_36 = arith.constant 0 : index
    %c0_37 = arith.constant 0 : index
    %64 = vector.load %arg8[%c0_35, %c2, %c0_36, %c0_37] : memref<1x4x8x8xf32, #tpu.memory_space<vmem>>, vector<1x1x8x8xf32>
    %65 = vector.shape_cast %64 : vector<1x1x8x8xf32> to vector<8x8xf32>
    %66 = vector.shape_cast %63 : vector<8x8xf32> to vector<1x1x8x8xf32>
    tpu.vector_store %arg8[%c0_35, %c2, %c0_36, %c0_37], %66 {strides = array<i32>} : memref<1x4x8x8xf32, #tpu.memory_space<vmem>>, vector<1x1x8x8xf32>,
    %cst_38 = arith.constant dense<0xFF800000> : vector<8xf32>
    %67 = vector.multi_reduction <maximumf>, %63, %cst_38 [1] : vector<8x8xf32> to vector<8xf32>
    %68 = vector.shape_cast %67 : vector<8xf32> to vector<8x1xf32>
    %69 = vector.broadcast %68 : vector<8x1xf32> to vector<8x8xf32>
    %70 = arith.subf %63, %69 : vector<8x8xf32>
    %71 = math.exp %70 : vector<8x8xf32>
    %cst_39 = arith.constant dense<0.000000e+00> : vector<8xf32>
    %72 = vector.multi_reduction <add>, %71, %cst_39 [1] : vector<8x8xf32> to vector<8xf32>
    %73 = vector.shape_cast %72 : vector<8xf32> to vector<8x1xf32>
    %74 = tpu.reciprocal %73 {approx = true} : vector<8x1xf32> -> vector<8x1xf32>
    %75 = vector.broadcast %74 : vector<8x1xf32> to vector<8x8xf32>
    %76 = arith.mulf %71, %75 : vector<8x8xf32>
    %77 = arith.truncf %76 : vector<8x8xf32> to vector<8x8xbf16>
    %cst_40 = arith.constant dense<0.000000e+00> : vector<8x8xf32>
    %78 = tpu.matmul %77, %58, %cst_40 {dimension_numbers = #tpu.dot_dimension_numbers<[1], [0], [0], [1], [0, 0, 1, 1], [], []>} : vector<8x8xbf16>, vector<8x8xbf16>, vector<8x8xf32> -> vector<8x8xf32>
    %79 = vector.extract_strided_slice %1 {offsets = [0, 24], sizes = [8, 8], strides = [1, 1]} : vector<8x32xbf16> to vector<8x8xbf16>
    %80 = vector.extract_strided_slice %3 {offsets = [0, 24], sizes = [8, 8], strides = [1, 1]} : vector<8x32xbf16> to vector<8x8xbf16>
    %81 = vector.extract_strided_slice %5 {offsets = [0, 24], sizes = [8, 8], strides = [1, 1]} : vector<8x32xbf16> to vector<8x8xbf16>
    %cst_41 = arith.constant dense<0.000000e+00> : vector<8x8xf32>
    %82 = tpu.matmul %79, %80, %cst_41 {dimension_numbers = #tpu.dot_dimension_numbers<[1], [1], [0], [0], [0, 0, 1, 0], [], []>} : vector<8x8xbf16>, vector<8x8xbf16>, vector<8x8xf32> -> vector<8x8xf32>
    %cst_42 = arith.constant 0.353553385 : f32
    %83 = vector.broadcast %cst_42 : f32 to vector<8x8xf32>
    %84 = arith.mulf %82, %83 : vector<8x8xf32>
    %85 = arith.mulf %84, %7 : vector<8x8xf32>
    %86 = arith.addf %85, %9 : vector<8x8xf32>
    %c0_43 = arith.constant 0 : index
    %c3 = arith.constant 3 : index
    %c0_44 = arith.constant 0 : index
    %c0_45 = arith.constant 0 : index
    %87 = vector.load %arg8[%c0_43, %c3, %c0_44, %c0_45] : memref<1x4x8x8xf32, #tpu.memory_space<vmem>>, vector<1x1x8x8xf32>
    %88 = vector.shape_cast %87 : vector<1x1x8x8xf32> to vector<8x8xf32>
    %89 = vector.shape_cast %86 : vector<8x8xf32> to vector<1x1x8x8xf32>
    tpu.vector_store %arg8[%c0_43, %c3, %c0_44, %c0_45], %89 {strides = array<i32>} : memref<1x4x8x8xf32, #tpu.memory_space<vmem>>, vector<1x1x8x8xf32>,
    %cst_46 = arith.constant dense<0xFF800000> : vector<8xf32>
    %90 = vector.multi_reduction <maximumf>, %86, %cst_46 [1] : vector<8x8xf32> to vector<8xf32>
    %91 = vector.shape_cast %90 : vector<8xf32> to vector<8x1xf32>
    %92 = vector.broadcast %91 : vector<8x1xf32> to vector<8x8xf32>
    %93 = arith.subf %86, %92 : vector<8x8xf32>
    %94 = math.exp %93 : vector<8x8xf32>
    %cst_47 = arith.constant dense<0.000000e+00> : vector<8xf32>
    %95 = vector.multi_reduction <add>, %94, %cst_47 [1] : vector<8x8xf32> to vector<8xf32>
    %96 = vector.shape_cast %95 : vector<8xf32> to vector<8x1xf32>
    %97 = tpu.reciprocal %96 {approx = true} : vector<8x1xf32> -> vector<8x1xf32>
    %98 = vector.broadcast %97 : vector<8x1xf32> to vector<8x8xf32>
    %99 = arith.mulf %94, %98 : vector<8x8xf32>
    %100 = arith.truncf %99 : vector<8x8xf32> to vector<8x8xbf16>
    %cst_48 = arith.constant dense<0.000000e+00> : vector<8x8xf32>
    %101 = tpu.matmul %100, %81, %cst_48 {dimension_numbers = #tpu.dot_dimension_numbers<[1], [0], [0], [1], [0, 0, 1, 1], [], []>} : vector<8x8xbf16>, vector<8x8xbf16>, vector<8x8xf32> -> vector<8x8xf32>
    %102 = tpu.concatenate %32, %55, %78, %101 in 1 : vector<8x8xf32>, vector<8x8xf32>, vector<8x8xf32>, vector<8x8xf32> -> vector<8x32xf32>
    %103 = arith.truncf %102 : vector<8x32xf32> to vector<8x32xbf16>
    %c0_49 = arith.constant 0 : index
    %c0_50 = arith.constant 0 : index
    %c0_51 = arith.constant 0 : index
    %104 = vector.load %arg7[%c0_49, %c0_50, %c0_51] : memref<1x8x32xbf16, #tpu.memory_space<vmem>>, vector<1x8x32xbf16>
    %105 = vector.shape_cast %104 : vector<1x8x32xbf16> to vector<8x32xbf16>
    %106 = vector.shape_cast %103 : vector<8x32xbf16> to vector<1x8x32xbf16>
    tpu.vector_store %arg7[%c0_49, %c0_50, %c0_51], %106 {strides = array<i32>} : memref<1x8x32xbf16, #tpu.memory_space<vmem>>, vector<1x8x32xbf16>,
    return
  }
  func.func @transform_0(%arg0: i32, %arg1: i32) -> (i32, i32, i32, i32) {
    %c0_i32 = arith.constant 0 : i32
    %c0_i32_0 = arith.constant 0 : i32
    %c0_i32_1 = arith.constant 0 : i32
    return %c0_i32, %arg0, %arg1, %c0_i32_0 : i32, i32, i32, i32
  }
  func.func @transform_1(%arg0: i32, %arg1: i32) -> (i32, i32, i32, i32) {
    %c1_i32 = arith.constant 1 : i32
    %c0_i32 = arith.constant 0 : i32
    %c0_i32_0 = arith.constant 0 : i32
    %c0_i32_1 = arith.constant 0 : i32
    return %c1_i32, %arg0, %c0_i32, %c0_i32_0 : i32, i32, i32, i32
  }
  func.func @transform_2(%arg0: i32, %arg1: i32) -> (i32, i32, i32, i32) {
    %c2_i32 = arith.constant 2 : i32
    %c0_i32 = arith.constant 0 : i32
    %c0_i32_0 = arith.constant 0 : i32
    %c0_i32_1 = arith.constant 0 : i32
    return %c2_i32, %arg0, %c0_i32, %c0_i32_0 : i32, i32, i32, i32
  }
  func.func @transform_3(%arg0: i32, %arg1: i32) -> (i32, i32, i32) {
    %c0_i32 = arith.constant 0 : i32
    %c0_i32_0 = arith.constant 0 : i32
    %c0_i32_1 = arith.constant 0 : i32
    return %c0_i32, %arg1, %c0_i32_0 : i32, i32, i32
  }
  func.func @transform_4(%arg0: i32, %arg1: i32) -> (i32, i32, i32) {
    %c0_i32 = arith.constant 0 : i32
    %c0_i32_0 = arith.constant 0 : i32
    %c0_i32_1 = arith.constant 0 : i32
    return %c0_i32, %arg1, %c0_i32_0 : i32, i32, i32
  }
  func.func @transform_5(%arg0: i32, %arg1: i32) -> (i32, i32, i32) {
    %c0_i32 = arith.constant 0 : i32
    %c0_i32_0 = arith.constant 0 : i32
    return %arg0, %arg1, %c0_i32 : i32, i32, i32
  }
  func.func @transform_6(%arg0: i32, %arg1: i32) -> (i32, i32, i32, i32) {
    %c0_i32 = arith.constant 0 : i32
    %c0_i32_0 = arith.constant 0 : i32
    %c0_i32_1 = arith.constant 0 : i32
    return %arg0, %c0_i32, %arg1, %c0_i32_0 : i32, i32, i32, i32
  }
}

</mosaic_0001>

<llo_original>
// kernel: mha_relb_forward.3
$region0: #{mha_relb_forward.3}
  #allocation0 [shape = 'u32[]', space=smem, size = 0x4, offset = 0x4, fixed_abs, tag = 'smem constant byte address 0x4 - core index']
  #allocation1 [shape = 'u32[144,128]{1,0:T(1,128)}', space=vmem, size = 0x12000, scoped, tag = 'internal scratch']
  %s0 = inlined_call_operand.vmem [shape: bf16[3,16,32], index: 0, kind: input, shape index: {}]
  %s1 = inlined_call_operand.vmem [shape: bf16[3,32,32], index: 1, kind: input, shape index: {}]
  %s2 = inlined_call_operand.vmem [shape: f32[3,1,32], index: 2, kind: input, shape index: {}]
  %s3 = inlined_call_operand.vmem [shape: bf16[3,16,32], index: 3, kind: output, shape index: {}]
  %s4 = sld [smem:[#allocation0]]
  $region45: #{mha_relb_forward.3} parent=0
    _
  %s6 = ssub.s32 1, %s4
  %s7 = scalar_select 0, %s6, %s4
  loop: start=0, step=1, limit=5
  $region2: #{mha_relb_forward.3} parent=0 // loop_pre_header
    _
  $region3: #{mha_relb_forward.3} parent=0 // loop_header
    %s9 = sphi 0, %s13
    %p10 = scmp.ge.s32.totalorder %s9, 5
    %s16 = sphi 0, %s28
    %s17 = sphi 0, %s24
    %s18 = sphi 0, %s16
    %s19 = sphi 0, %s17
    %s20 = sphi 0, %s18
    %s21 = sphi 0, %s19
    %s33 = sphi 0, %s35
    %s36 = sphi 0, %s33
    %s37 = sphi 0, %s36
    %s53 = sphi 0, %s37
    %s59 = sphi 0, %s61
    %s62 = sphi 0, %s59
    %s63 = sphi 0, %s62
    %s79 = sphi 0, %s63
    %s85 = sphi 0, %s87
    %s88 = sphi 0, %s85
    %s89 = sphi 0, %s88
    %s105 = sphi 0, %s89
    %s113 = sphi 0, %s115
    %s116 = sphi 0, %s113
    %s117 = sphi 0, %s116
    %s133 = sphi 0, %s117
  $region4: #{mha_relb_forward.3} parent=0 // loop_header_branch
    %12 = sbr.rel (%p10) target = $region8
  $region5: #{mha_relb_forward.3} parent=0 // loop_body
    %s14 = ssub.s32 %s9, 1
    %s15 = ssub.s32 %s9, 2
    %s22 = sadd.s32 1, %s17
    %p23 = scmp.ge.s32.totalorder %s22, 1
    %s24 = scalar_select %p23, 0, %s22
    %s25 = sadd.s32 1, %s16
    %s26 = scalar_select %p23, %s25, %s16
    %p27 = scmp.ge.s32.totalorder %s26, 3
    %s28 = scalar_select %p27, 0, %s26
    %s29 = ssub.s32 %s16, %s28
    %s30 = ssub.s32 %s17, %s24
    %s31 = sor.u32 %s29, %s30
    %p32 = scmp.eq.s32.totalorder %s31, 0
    %s34 = sadd.s32 %s33, 1
    %s35 = scalar_select %p32, %s33, %s34
    %p38 = pneg %p32
    %p39 = scmp.eq.s32.totalorder %s9, 2
    %p40 = por %p38, %p39
    %p41 = scmp.ne.s32.totalorder %s33, %s36
    %p42 = scmp.eq.s32.totalorder %s9, 0
    %p43 = por %p41, %p42
    %p44 = scmp.ne.s32.totalorder %s33, %s36
    %p45 = scmp.eq.s32.totalorder %s14, 2
    %p46 = por %p44, %p45
    %p47 = scmp.ne.s32.totalorder %s36, %s37
    %p48 = scmp.eq.s32.totalorder %s14, 0
    %p49 = por %p47, %p48
    %p50 = scmp.ne.s32.totalorder %s36, %s37
    %p51 = scmp.eq.s32.totalorder %s15, 2
    %p52 = por %p50, %p51
    %p54 = scmp.ne.s32.totalorder %s37, %s53
    %p55 = scmp.eq.s32.totalorder %s15, 0
    %p56 = por %p54, %p55
    %s57 = ssub.s32 %s16, %s28
    %p58 = scmp.eq.s32.totalorder %s57, 0
    %s60 = sadd.s32 %s59, 1
    %s61 = scalar_select %p58, %s59, %s60
    %p64 = pneg %p58
    %p65 = scmp.eq.s32.totalorder %s9, 2
    %p66 = por %p64, %p65
    %p67 = scmp.ne.s32.totalorder %s59, %s62
    %p68 = scmp.eq.s32.totalorder %s9, 0
    %p69 = por %p67, %p68
    %p70 = scmp.ne.s32.totalorder %s59, %s62
    %p71 = scmp.eq.s32.totalorder %s14, 2
    %p72 = por %p70, %p71
    %p73 = scmp.ne.s32.totalorder %s62, %s63
    %p74 = scmp.eq.s32.totalorder %s14, 0
    %p75 = por %p73, %p74
    %p76 = scmp.ne.s32.totalorder %s62, %s63
    %p77 = scmp.eq.s32.totalorder %s15, 2
    %p78 = por %p76, %p77
    %p80 = scmp.ne.s32.totalorder %s63, %s79
    %p81 = scmp.eq.s32.totalorder %s15, 0
    %p82 = por %p80, %p81
    %s83 = ssub.s32 %s16, %s28
    %p84 = scmp.eq.s32.totalorder %s83, 0
    %s86 = sadd.s32 %s85, 1
    %s87 = scalar_select %p84, %s85, %s86
    %p90 = pneg %p84
    %p91 = scmp.eq.s32.totalorder %s9, 2
    %p92 = por %p90, %p91
    %p93 = scmp.ne.s32.totalorder %s85, %s88
    %p94 = scmp.eq.s32.totalorder %s9, 0
    %p95 = por %p93, %p94
    %p96 = scmp.ne.s32.totalorder %s85, %s88
    %p97 = scmp.eq.s32.totalorder %s14, 2
    %p98 = por %p96, %p97
    %p99 = scmp.ne.s32.totalorder %s88, %s89
    %p100 = scmp.eq.s32.totalorder %s14, 0
    %p101 = por %p99, %p100
    %p102 = scmp.ne.s32.totalorder %s88, %s89
    %p103 = scmp.eq.s32.totalorder %s15, 2
    %p104 = por %p102, %p103
    %p106 = scmp.ne.s32.totalorder %s89, %s105
    %p107 = scmp.eq.s32.totalorder %s15, 0
    %p108 = por %p106, %p107
    %s109 = ssub.s32 %s16, %s28
    %s110 = ssub.s32 %s17, %s24
    %s111 = sor.u32 %s109, %s110
    %p112 = scmp.eq.s32.totalorder %s111, 0
    %s114 = sadd.s32 %s113, 1
    %s115 = scalar_select %p112, %s113, %s114
    %p118 = pneg %p112
    %p119 = scmp.eq.s32.totalorder %s9, 2
    %p120 = por %p118, %p119
    %p121 = scmp.ne.s32.totalorder %s113, %s116
    %p122 = scmp.eq.s32.totalorder %s9, 0
    %p123 = por %p121, %p122
    %p124 = scmp.ne.s32.totalorder %s113, %s116
    %p125 = scmp.eq.s32.totalorder %s14, 2
    %p126 = por %p124, %p125
    %p127 = scmp.ne.s32.totalorder %s116, %s117
    %p128 = scmp.eq.s32.totalorder %s14, 0
    %p129 = por %p127, %p128
    %p130 = scmp.ne.s32.totalorder %s116, %s117
    %p131 = scmp.eq.s32.totalorder %s15, 2
    %p132 = por %p130, %p131
    %p134 = scmp.ne.s32.totalorder %s117, %s133
    %p135 = scmp.eq.s32.totalorder %s15, 0
    %p136 = por %p134, %p135
    %p137 = scmp.le.s32.totalorder 1, %s9
    %p138 = scmp.lt.s32.totalorder %s9, 4
    %p139 = pnand %p137, %p138
    %p140 = pneg %p139
    // Predicated region
    $region9: #{mha_relb_forward.3} parent=5 // pred_check
      _
    $region10: #{mha_relb_forward.3} parent=5 // pred_check_branch
      %142 = sbr.rel (%p139) target = $region12
    $region11: #{mha_relb_forward.3} parent=5 // pred_region
      %s143 = ssub.s32 %s9, 1
    $region12: #{mha_relb_forward.3} parent=5 // pred_fallthru
      _
    %p144 = scmp.lt.s32.totalorder %s9, 3
    // Predicated region
    $region13: #{mha_relb_forward.3} parent=5 // pred_check
      %p145 = pneg %p144
    $region14: #{mha_relb_forward.3} parent=5 // pred_check_branch
      %147 = sbr.rel (%p145) target = $region16
    $region15: #{mha_relb_forward.3} parent=5 // pred_region
      // Predicated region
      $region17: #{mha_relb_forward.3} parent=15 // pred_check
        %p148 = pneg %p43
      $region18: #{mha_relb_forward.3} parent=15 // pred_check_branch
        %150 = sbr.rel (%p148) target = $region20
      $region19: #{mha_relb_forward.3} parent=15 // pred_region
        %s151 = smul.u32 2, %s17
        %p152 = scmp.lt.s32.totalorder %s16, 2
        %s153 = scalar_select %p152, %s16, 2
        %p154 = scmp.lt.s32.totalorder %s151, 1
        %s155 = scalar_select %p154, %s151, 1
        %s156 = smul.addr %s153, 2
        %s157 = sadd.s32 %s155, %s156
        %s158 = smul.addr %s157, 4
        %s159 = scalar_lea.vmem %s0, %s158
        %s160 = smul.u32 2, %s17
      $region20: #{mha_relb_forward.3} parent=15 // pred_fallthru
        _
      // Predicated region
      $region21: #{mha_relb_forward.3} parent=15 // pred_check
        %p161 = pneg %p69
      $region22: #{mha_relb_forward.3} parent=15 // pred_check_branch
        %163 = sbr.rel (%p161) target = $region24
      $region23: #{mha_relb_forward.3} parent=15 // pred_region
        %p164 = scmp.lt.s32.totalorder %s16, 2
        %s165 = scalar_select %p164, %s16, 2
        %s166 = smul.addr %s165, 4
        %s167 = smul.addr %s166, 4
        %s168 = scalar_lea.vmem %s1, %s167
      $region24: #{mha_relb_forward.3} parent=15 // pred_fallthru
        _
      // Predicated region
      $region25: #{mha_relb_forward.3} parent=15 // pred_check
        %p169 = pneg %p95
      $region26: #{mha_relb_forward.3} parent=15 // pred_check_branch
        %171 = sbr.rel (%p169) target = $region28
      $region27: #{mha_relb_forward.3} parent=15 // pred_region
        %p172 = scmp.lt.s32.totalorder %s16, 2
        %s173 = scalar_select %p172, %s16, 2
        %s174 = scalar_lea.vmem %s2, %s173
      $region28: #{mha_relb_forward.3} parent=15 // pred_fallthru
        _
    $region16: #{mha_relb_forward.3} parent=5 // pred_fallthru
      _
    %p175 = scmp.le.s32.totalorder 1, %s9
    %p176 = scmp.lt.s32.totalorder %s9, 4
    %p177 = pnand %p175, %p176
    %p178 = pneg %p177
    // Predicated region
    $region29: #{mha_relb_forward.3} parent=5 // pred_check
      _
    $region30: #{mha_relb_forward.3} parent=5 // pred_check_branch
      %180 = sbr.rel (%p177) target = $region32
    $region31: #{mha_relb_forward.3} parent=5 // pred_region
      %s181 = ssub.s32 %s9, 1
      %s182 = smul.u32 2, %s19
      %p183 = scmp.lt.s32.totalorder %s18, 2
      %s184 = scalar_select %p183, %s18, 2
      %p185 = scmp.lt.s32.totalorder %s182, 1
      %s186 = scalar_select %p185, %s182, 1
      %s187 = smul.addr %s184, 2
      %s188 = sadd.s32 %s186, %s187
      %s189 = smul.addr %s188, 4
      %s190 = scalar_lea.vmem %s0, %s189
      %p191 = pneg %p49
      %p192 = pneg %p46
      %p193 = scmp.lt.s32.totalorder %s18, 2
      %s194 = scalar_select %p193, %s18, 2
      %s195 = smul.addr %s194, 4
      %s196 = smul.addr %s195, 4
      %s197 = scalar_lea.vmem %s1, %s196
      %p198 = pneg %p75
      %p199 = pneg %p72
      %p200 = scmp.lt.s32.totalorder %s18, 2
      %s201 = scalar_select %p200, %s18, 2
      %s202 = scalar_lea.vmem %s2, %s201
      %p203 = pneg %p101
      %p204 = pneg %p98
      %p205 = pneg %p129
      %p206 = pneg %p126
      %s207 = smul.u32 2, %s19
      %p208 = scmp.lt.s32.totalorder %s18, 2
      %s209 = scalar_select %p208, %s18, 2
      %p210 = scmp.lt.s32.totalorder %s207, 1
      %s211 = scalar_select %p210, %s207, 1
      %s212 = smul.addr %s209, 2
      %s213 = sadd.s32 %s211, %s212
      %s214 = smul.addr %s213, 4
      %s215 = scalar_lea.vmem %s3, %s214
      %s216 = smul.u32 2, %s19
      %p217 = scmp.lt.s32.totalorder %s18, 2
      %s218 = scalar_select %p217, %s18, 2
      %p219 = scmp.lt.s32.totalorder %s216, 1
      %s220 = scalar_select %p219, %s216, 1
      %s221 = smul.addr %s218, 2
      %s222 = sadd.s32 %s220, %s221
      %s223 = smul.addr %s222, 4
      %s224 = scalar_lea.vmem %s0, %s223
      %s225 = smul.u32 2, %s19
      %p226 = scmp.lt.s32.totalorder %s18, 2
      %s227 = scalar_select %p226, %s18, 2
      %s228 = smul.addr %s227, 4
      %s229 = smul.addr %s228, 4
      %s230 = scalar_lea.vmem %s1, %s229
      %p231 = scmp.lt.s32.totalorder %s18, 2
      %s232 = scalar_select %p231, %s18, 2
      %s233 = scalar_lea.vmem %s2, %s232
      %s234 = smul.u32 2, %s19
      %p235 = scmp.lt.s32.totalorder %s18, 2
      %s236 = scalar_select %p235, %s18, 2
      %p237 = scmp.lt.s32.totalorder %s234, 1
      %s238 = scalar_select %p237, %s234, 1
      %s239 = smul.addr %s236, 2
      %s240 = sadd.s32 %s238, %s239
      %s241 = smul.addr %s240, 4
      %s242 = scalar_lea.vmem %s3, %s241
      %s243 = smul.u32 2, %s19
      %v245 = vld [vmem:[%s224] sm:$0xf]
      %v246 = vld [vmem:[%s224 + $0x4] sm:$0xf]
      %v247 = vld [vmem:[%s230] sm:$0xf]
      %v248 = vld [vmem:[%s230 + $0x4] sm:$0xf]
      %v249 = vld [vmem:[%s230 + $0x8] sm:$0xf]
      %v250 = vld [vmem:[%s230 + $0xc] sm:$0xf]
      %v251 = vld [vmem:[%s233] sm:$0x1]
      %v253 = vlaneseq
      %v254 = vshrl.u32 %v253, 7
      %v255 = vsub.s32 0, %v254
      %v256 = vrot.slane %v251, %v255
      %v260 = vunpack.c.l.b16 %v245
      %v261 = vunpack.c.l.b16 %v246
      %v262 = vpack.c.b16 %v261, %v260
      %v267 = vunpack.c.l.b16 %v247
      %v268 = vunpack.c.l.b16 %v248
      %v269 = vunpack.c.l.b16 %v249
      %v270 = vunpack.c.l.b16 %v250
      %v271 = vpack.c.b16 %v268, %v267
      %v272 = vpack.c.b16 %v270, %v269
      %vm275 = vcmask 261120
      %v277 = vsel %vm275, %v262, 0
      %279 = vmatprep.subr.bf16.mxu0 0
      %280 = vmatpush1.bf16.msra.mxu0 %v271
      %281 = vmatprep.subr.bf16.mxu0 0
      %282 = vmatpush1.bf16.msra.mxu0 %v272
      %283 = vmatprep.subr.bf16.mxu0 0
      %284 = vmatpush1.bf16.msra.mxu0 0
      %285 = vmatprep.subr.bf16.mxu0 0
      %286 = vmatpush1.bf16.msra.mxu0 0
      %287 = vmatprep.subr.bf16.mxu0 0
      %288 = vmatpush1.bf16.msra.mxu0 0
      %289 = vmatprep.subr.bf16.mxu0 0
      %290 = vmatpush1.bf16.msra.mxu0 0
      %291 = vmatprep.subr.bf16.mxu0 0
      %292 = vmatpush1.bf16.msra.mxu0 0
      %293 = vmatprep.subr.bf16.mxu0 0
      %294 = vmatpush1.bf16.msra.mxu0 0
      %295 = vmatprep.subr.bf16.mxu0 0
      %296 = vmatpush1.bf16.msra.mxu0 0
      %297 = vmatprep.subr.bf16.mxu0 0
      %298 = vmatpush1.bf16.msra.mxu0 0
      %299 = vmatprep.subr.bf16.mxu0 0
      %300 = vmatpush1.bf16.msra.mxu0 0
      %301 = vmatprep.subr.bf16.mxu0 0
      %302 = vmatpush1.bf16.msra.mxu0 0
      %303 = vmatprep.subr.bf16.mxu0 0
      %304 = vmatpush1.bf16.msra.mxu0 0
      %305 = vmatprep.subr.bf16.mxu0 0
      %306 = vmatpush1.bf16.msra.mxu0 0
      %307 = vmatprep.subr.bf16.mxu0 0
      %308 = vmatpush1.bf16.msra.mxu0 0
      %309 = vmatprep.subr.bf16.mxu0 0
      %310 = vmatpush1.bf16.msra.mxu0 0
      %311 = vmatprep.mubr.bf16.mxu0 0
      %312 = vmatmul.mubr.bf16.gmra.mrb[0].mxu0 %v277
      %v313 = vpop.f32.mrb[0].mxu0
      %v314 = vadd.f32 %v256, %v313
      %v315 = vpop.f32.mrb[0].mxu0
      %v316 = vpop.f32.mrb[0].mxu0
      %v317 = vadd.f32 %v256, %v316
      %v318 = vpop.f32.mrb[0].mxu0
      %319 = vdwg.mxu0
      %v320 = vpack.c.bf16 %v317, %v314
      %v322 = vunpack.c.l.b16 %v320
      %v323 = vunpack.c.h.b16 %v320
      %v324 = vpack.c.b16 %v322, %v322
      %v325 = vpack.c.b16 %v323, %v323
      %vm328 = vcmask 257024
      %329 = vst.msk [vmem:[%s242] sm:$0xf] %vm328, %v324
      %330 = vst.msk [vmem:[%s242 + $0x4] sm:$0xf] %vm328, %v325
      %s331 = smul.u32 2, %s19
      %p332 = scmp.lt.s32.totalorder %s18, 2
      %s333 = scalar_select %p332, %s18, 2
      %p334 = scmp.lt.s32.totalorder %s331, 1
      %s335 = scalar_select %p334, %s331, 1
      %s336 = smul.addr %s333, 2
      %s337 = sadd.s32 %s335, %s336
      %s338 = smul.addr %s337, 4
      %s339 = scalar_lea.vmem %s3, %s338
      // Predicated region
      $region33: #{mha_relb_forward.3} parent=31 // pred_check
        %p340 = pneg %p126
      $region34: #{mha_relb_forward.3} parent=31 // pred_check_branch
        %342 = sbr.rel (%p340) target = $region36
      $region35: #{mha_relb_forward.3} parent=31 // pred_region
        %s343 = smul.u32 2, %s19
      $region36: #{mha_relb_forward.3} parent=31 // pred_fallthru
        _
    $region32: #{mha_relb_forward.3} parent=5 // pred_fallthru
      _
    %p344 = scmp.le.s32.totalorder 2, %s9
    // Predicated region
    $region37: #{mha_relb_forward.3} parent=5 // pred_check
      %p345 = pneg %p344
    $region38: #{mha_relb_forward.3} parent=5 // pred_check_branch
      %347 = sbr.rel (%p345) target = $region40
    $region39: #{mha_relb_forward.3} parent=5 // pred_region
      %s348 = ssub.s32 %s9, 2
      // Predicated region
      $region41: #{mha_relb_forward.3} parent=39 // pred_check
        %p349 = pneg %p132
      $region42: #{mha_relb_forward.3} parent=39 // pred_check_branch
        %351 = sbr.rel (%p349) target = $region44
      $region43: #{mha_relb_forward.3} parent=39 // pred_region
        %s352 = smul.u32 2, %s21
        %p353 = scmp.lt.s32.totalorder %s20, 2
        %s354 = scalar_select %p353, %s20, 2
        %p355 = scmp.lt.s32.totalorder %s352, 1
        %s356 = scalar_select %p355, %s352, 1
        %s357 = smul.addr %s354, 2
        %s358 = sadd.s32 %s356, %s357
        %s359 = smul.addr %s358, 4
        %s360 = scalar_lea.vmem %s3, %s359
      $region44: #{mha_relb_forward.3} parent=39 // pred_fallthru
        _
    $region40: #{mha_relb_forward.3} parent=5 // pred_fallthru
      _
  $region6: #{mha_relb_forward.3} parent=0 // loop_footer
    %s13 = sadd.s32 1, %s9
  $region7: #{mha_relb_forward.3} parent=0 // loop_footer_branch
    %8 = sbr.rel target = $region3
  $region8: #{mha_relb_forward.3} parent=0 // loop_exit
    _

// kernel: mha_relb_forward.5
$region0: #{mha_relb_forward.5}
  #allocation0 [shape = 'u32[]', space=smem, size = 0x4, offset = 0x4, fixed_abs, tag = 'smem constant byte address 0x4 - core index']
  #allocation1 [shape = 'u32[144,128]{1,0:T(1,128)}', space=vmem, size = 0x12000, scoped, tag = 'internal scratch']
  %s0 = inlined_call_operand.vmem [shape: bf16[16,32], index: 0, kind: input, shape index: {}]
  %s1 = inlined_call_operand.vmem [shape: bf16[32,32], index: 1, kind: input, shape index: {}]
  %s2 = inlined_call_operand.vmem [shape: f32[1,32], index: 2, kind: input, shape index: {}]
  %s3 = inlined_call_operand.hbm [shape: f32[16,32], index: 3, kind: output, shape index: {}]
  %s4 = sld [smem:[#allocation0]]
  $region22: #{mha_relb_forward.5} parent=0
    _
  %s6 = ssub.s32 1, %s4
  %s7 = scalar_select 0, %s6, %s4
  $region1: #{mha_relb_forward.5} parent=0
    #allocation2 [shape = 'u8[8192]{0}', space=vmem, size = 0x2000, scoped, tag = 'output window, operand 0, single buffered']
    #allocation3 [shape = 's32[1]{0}', space=sflag, size = 0x4, scoped, tag = 'scoped memory for mha_relb_forward.5']
    %8 = vsyncpa [#allocation3], 0
    // Predicated region
    $region2: #{mha_relb_forward.5} parent=1 // pred_check
      _
    $region3: #{mha_relb_forward.5} parent=1 // pred_check_branch
      %10 = sbr.rel (0) target = $region5
    $region4: #{mha_relb_forward.5} parent=1 // pred_region
      _
    $region5: #{mha_relb_forward.5} parent=1 // pred_fallthru
      _
    // Predicated region
    $region6: #{mha_relb_forward.5} parent=1 // pred_check
      _
    $region7: #{mha_relb_forward.5} parent=1 // pred_check_branch
      %12 = sbr.rel (0) target = $region9
    $region8: #{mha_relb_forward.5} parent=1 // pred_region
      _
    $region9: #{mha_relb_forward.5} parent=1 // pred_fallthru
      _
    // Predicated region
    $region10: #{mha_relb_forward.5} parent=1 // pred_check
      _
    $region11: #{mha_relb_forward.5} parent=1 // pred_check_branch
      %14 = sbr.rel (0) target = $region13
    $region12: #{mha_relb_forward.5} parent=1 // pred_region
      _
    $region13: #{mha_relb_forward.5} parent=1 // pred_fallthru
      _
    %v16 = vld [vmem:[%s0] sm:$0xf]
    %v17 = vld [vmem:[%s0 + $0x4] sm:$0xf]
    %v18 = vld [vmem:[%s1] sm:$0xf]
    %v19 = vld [vmem:[%s1 + $0x4] sm:$0xf]
    %v20 = vld [vmem:[%s1 + $0x8] sm:$0xf]
    %v21 = vld [vmem:[%s1 + $0xc] sm:$0xf]
    %v22 = vld [vmem:[%s2] sm:$0x1]
    %v24 = vlaneseq
    %v25 = vshrl.u32 %v24, 7
    %v26 = vsub.s32 0, %v25
    %v27 = vrot.slane %v22, %v26
    %v31 = vunpack.c.l.b16 %v16
    %v32 = vunpack.c.l.b16 %v17
    %v33 = vpack.c.b16 %v32, %v31
    %v38 = vunpack.c.l.b16 %v18
    %v39 = vunpack.c.l.b16 %v19
    %v40 = vunpack.c.l.b16 %v20
    %v41 = vunpack.c.l.b16 %v21
    %v42 = vpack.c.b16 %v39, %v38
    %v43 = vpack.c.b16 %v41, %v40
    %vm46 = vcmask 261120
    %v48 = vsel %vm46, %v33, 0
    %50 = vmatprep.subr.bf16.mxu0 0
    %51 = vmatpush1.bf16.msra.mxu0 %v42
    %52 = vmatprep.subr.bf16.mxu0 0
    %53 = vmatpush1.bf16.msra.mxu0 %v43
    %54 = vmatprep.subr.bf16.mxu0 0
    %55 = vmatpush1.bf16.msra.mxu0 0
    %56 = vmatprep.subr.bf16.mxu0 0
    %57 = vmatpush1.bf16.msra.mxu0 0
    %58 = vmatprep.subr.bf16.mxu0 0
    %59 = vmatpush1.bf16.msra.mxu0 0
    %60 = vmatprep.subr.bf16.mxu0 0
    %61 = vmatpush1.bf16.msra.mxu0 0
    %62 = vmatprep.subr.bf16.mxu0 0
    %63 = vmatpush1.bf16.msra.mxu0 0
    %64 = vmatprep.subr.bf16.mxu0 0
    %65 = vmatpush1.bf16.msra.mxu0 0
    %66 = vmatprep.subr.bf16.mxu0 0
    %67 = vmatpush1.bf16.msra.mxu0 0
    %68 = vmatprep.subr.bf16.mxu0 0
    %69 = vmatpush1.bf16.msra.mxu0 0
    %70 = vmatprep.subr.bf16.mxu0 0
    %71 = vmatpush1.bf16.msra.mxu0 0
    %72 = vmatprep.subr.bf16.mxu0 0
    %73 = vmatpush1.bf16.msra.mxu0 0
    %74 = vmatprep.subr.bf16.mxu0 0
    %75 = vmatpush1.bf16.msra.mxu0 0
    %76 = vmatprep.subr.bf16.mxu0 0
    %77 = vmatpush1.bf16.msra.mxu0 0
    %78 = vmatprep.subr.bf16.mxu0 0
    %79 = vmatpush1.bf16.msra.mxu0 0
    %80 = vmatprep.subr.bf16.mxu0 0
    %81 = vmatpush1.bf16.msra.mxu0 0
    %82 = vmatprep.mubr.bf16.mxu0 0
    %83 = vmatmul.mubr.bf16.gmra.mrb[0].mxu0 %v48
    %v84 = vpop.f32.mrb[0].mxu0
    %v85 = vadd.f32 %v27, %v84
    %v86 = vpop.f32.mrb[0].mxu0
    %v87 = vpop.f32.mrb[0].mxu0
    %v88 = vadd.f32 %v27, %v87
    %v89 = vpop.f32.mrb[0].mxu0
    %90 = vdwg.mxu0
    %91 = vst.msk [vmem:[#allocation2] sm:$0xff] %vm46, %v85
    %92 = vst.msk [vmem:[#allocation2 + $0x8] sm:$0xff] %vm46, %v88
    // Predicated region
    $region14: #{mha_relb_forward.5} parent=1 // pred_check
      _
    $region15: #{mha_relb_forward.5} parent=1 // pred_check_branch
      %94 = sbr.rel (0) target = $region17
    $region16: #{mha_relb_forward.5} parent=1 // pred_region
      %s96 = ssub.s32 256, 256
      %97 = vsyncadd [#allocation3], %s96
      %s98 = sshll.u32 [#allocation2], 4
      %s99 = int_to_ptr.vmem [resolvable:$true] %s98
      %104 = dma.vmem_to_hbm [thread:$0]  %s99, 256, %s3, [#allocation3], 128, 128, 8
    $region17: #{mha_relb_forward.5} parent=1 // pred_fallthru
      _
    // Predicated region
    $region18: #{mha_relb_forward.5} parent=1 // pred_check
      _
    $region19: #{mha_relb_forward.5} parent=1 // pred_check_branch
      %106 = sbr.rel (0) target = $region21
    $region20: #{mha_relb_forward.5} parent=1 // pred_region
      %107 = dma.done [#allocation3], 256
    $region21: #{mha_relb_forward.5} parent=1 // pred_fallthru
      _
    %108 = vsyncpa [#allocation3], 1

// kernel: mha_relb_forward.4
$region0: #{mha_relb_forward.4}
  #allocation0 [shape = 'u32[]', space=smem, size = 0x4, offset = 0x4, fixed_abs, tag = 'smem constant byte address 0x4 - core index']
  #allocation1 [shape = 'u32[144,128]{1,0:T(1,128)}', space=vmem, size = 0x12000, scoped, tag = 'internal scratch']
  %s0 = inlined_call_operand.vmem [shape: bf16[3,2,8,32], index: 0, kind: input, shape index: {}, may-alias: {0,1,2}]
  %s1 = inlined_call_operand.vmem [shape: bf16[3,2,8,32], index: 1, kind: input, shape index: {}, may-alias: {0,1,2}]
  %s2 = inlined_call_operand.vmem [shape: bf16[3,2,8,32], index: 2, kind: input, shape index: {}, may-alias: {0,1,2}]
  %s3 = inlined_call_operand.vmem [shape: f32[1,8,8], index: 3, kind: input, shape index: {}]
  %s4 = inlined_call_operand.vmem [shape: f32[1,8,8], index: 4, kind: input, shape index: {}]
  %s5 = inlined_call_operand.vmem [shape: bf16[2,8,32], index: 5, kind: output, shape index: {0}]
  %s6 = inlined_call_operand.hbm [shape: f32[2,4,8,8], index: 6, kind: output, shape index: {1}]
  %7 = xla_tuple %s5, %s6
  %s8 = sld [smem:[#allocation0]]
  $region61: #{mha_relb_forward.4} parent=0
    _
  %s10 = ssub.s32 1, %s8
  %s11 = scalar_select 0, %s10, %s8
  $region1: #{mha_relb_forward.4} parent=0
    #allocation2 [shape = 'u8[32768]{0}', space=vmem, size = 0x8000, scoped, tag = 'output window, operand 1']
    #allocation3 [shape = 's32[2]{0}', space=sflag, size = 0x8, scoped, tag = 'scoped memory for mha_relb_forward.4']
    %12 = vsyncpa [#allocation3], 0
    %s13 = scalar_lea.sflag [#allocation3], 1
    %14 = vsyncpa %s13, 0
    loop: start=0, step=1, limit=4
    $region2: #{mha_relb_forward.4} parent=1 // loop_pre_header
      _
    $region3: #{mha_relb_forward.4} parent=1 // loop_header
      %s16 = sphi 0, %s20
      %p17 = scmp.ge.s32.totalorder %s16, 4
      %s23 = sphi 0, %s35
      %s24 = sphi 0, %s31
      %s25 = sphi 0, %s23
      %s26 = sphi 0, %s24
      %s27 = sphi 0, %s25
      %s28 = sphi 0, %s26
      %s40 = sphi 0, %s42
      %s43 = sphi 0, %s40
      %s44 = sphi 0, %s43
      %s60 = sphi 0, %s44
      %s66 = sphi 0, %s68
      %s69 = sphi 0, %s66
      %s70 = sphi 0, %s69
      %s86 = sphi 0, %s70
      %s92 = sphi 0, %s94
      %s95 = sphi 0, %s92
      %s96 = sphi 0, %s95
      %s112 = sphi 0, %s96
      %s118 = sphi 0, %s120
      %s121 = sphi 0, %s118
      %s122 = sphi 0, %s121
      %s138 = sphi 0, %s122
      %s144 = sphi 0, %s146
      %s147 = sphi 0, %s144
      %s148 = sphi 0, %s147
      %s164 = sphi 0, %s148
      %s172 = sphi 0, %s174
      %s175 = sphi 0, %s172
      %s176 = sphi 0, %s175
      %s192 = sphi 0, %s176
      %s200 = sphi 0, %s202
      %s203 = sphi 0, %s200
      %s204 = sphi 0, %s203
      %s220 = sphi 0, %s204
    $region4: #{mha_relb_forward.4} parent=1 // loop_header_branch
      %19 = sbr.rel (%p17) target = $region8
    $region5: #{mha_relb_forward.4} parent=1 // loop_body
      %s21 = ssub.s32 %s16, 1
      %s22 = ssub.s32 %s16, 2
      %s29 = sadd.s32 1, %s24
      %p30 = scmp.ge.s32.totalorder %s29, 1
      %s31 = scalar_select %p30, 0, %s29
      %s32 = sadd.s32 1, %s23
      %s33 = scalar_select %p30, %s32, %s23
      %p34 = scmp.ge.s32.totalorder %s33, 2
      %s35 = scalar_select %p34, 0, %s33
      %s36 = ssub.s32 %s23, %s35
      %s37 = ssub.s32 %s24, %s31
      %s38 = sor.u32 %s36, %s37
      %p39 = scmp.eq.s32.totalorder %s38, 0
      %s41 = sadd.s32 %s40, 1
      %s42 = scalar_select %p39, %s40, %s41
      %p45 = pneg %p39
      %p46 = scmp.eq.s32.totalorder %s16, 1
      %p47 = por %p45, %p46
      %p48 = scmp.ne.s32.totalorder %s40, %s43
      %p49 = scmp.eq.s32.totalorder %s16, 0
      %p50 = por %p48, %p49
      %p51 = scmp.ne.s32.totalorder %s40, %s43
      %p52 = scmp.eq.s32.totalorder %s21, 1
      %p53 = por %p51, %p52
      %p54 = scmp.ne.s32.totalorder %s43, %s44
      %p55 = scmp.eq.s32.totalorder %s21, 0
      %p56 = por %p54, %p55
      %p57 = scmp.ne.s32.totalorder %s43, %s44
      %p58 = scmp.eq.s32.totalorder %s22, 1
      %p59 = por %p57, %p58
      %p61 = scmp.ne.s32.totalorder %s44, %s60
      %p62 = scmp.eq.s32.totalorder %s22, 0
      %p63 = por %p61, %p62
      %s64 = ssub.s32 %s23, %s35
      %p65 = scmp.eq.s32.totalorder %s64, 0
      %s67 = sadd.s32 %s66, 1
      %s68 = scalar_select %p65, %s66, %s67
      %p71 = pneg %p65
      %p72 = scmp.eq.s32.totalorder %s16, 1
      %p73 = por %p71, %p72
      %p74 = scmp.ne.s32.totalorder %s66, %s69
      %p75 = scmp.eq.s32.totalorder %s16, 0
      %p76 = por %p74, %p75
      %p77 = scmp.ne.s32.totalorder %s66, %s69
      %p78 = scmp.eq.s32.totalorder %s21, 1
      %p79 = por %p77, %p78
      %p80 = scmp.ne.s32.totalorder %s69, %s70
      %p81 = scmp.eq.s32.totalorder %s21, 0
      %p82 = por %p80, %p81
      %p83 = scmp.ne.s32.totalorder %s69, %s70
      %p84 = scmp.eq.s32.totalorder %s22, 1
      %p85 = por %p83, %p84
      %p87 = scmp.ne.s32.totalorder %s70, %s86
      %p88 = scmp.eq.s32.totalorder %s22, 0
      %p89 = por %p87, %p88
      %s90 = ssub.s32 %s23, %s35
      %p91 = scmp.eq.s32.totalorder %s90, 0
      %s93 = sadd.s32 %s92, 1
      %s94 = scalar_select %p91, %s92, %s93
      %p97 = pneg %p91
      %p98 = scmp.eq.s32.totalorder %s16, 1
      %p99 = por %p97, %p98
      %p100 = scmp.ne.s32.totalorder %s92, %s95
      %p101 = scmp.eq.s32.totalorder %s16, 0
      %p102 = por %p100, %p101
      %p103 = scmp.ne.s32.totalorder %s92, %s95
      %p104 = scmp.eq.s32.totalorder %s21, 1
      %p105 = por %p103, %p104
      %p106 = scmp.ne.s32.totalorder %s95, %s96
      %p107 = scmp.eq.s32.totalorder %s21, 0
      %p108 = por %p106, %p107
      %p109 = scmp.ne.s32.totalorder %s95, %s96
      %p110 = scmp.eq.s32.totalorder %s22, 1
      %p111 = por %p109, %p110
      %p113 = scmp.ne.s32.totalorder %s96, %s112
      %p114 = scmp.eq.s32.totalorder %s22, 0
      %p115 = por %p113, %p114
      %s116 = ssub.s32 %s24, %s31
      %p117 = scmp.eq.s32.totalorder %s116, 0
      %s119 = sadd.s32 %s118, 1
      %s120 = scalar_select %p117, %s118, %s119
      %p123 = pneg %p117
      %p124 = scmp.eq.s32.totalorder %s16, 1
      %p125 = por %p123, %p124
      %p126 = scmp.ne.s32.totalorder %s118, %s121
      %p127 = scmp.eq.s32.totalorder %s16, 0
      %p128 = por %p126, %p127
      %p129 = scmp.ne.s32.totalorder %s118, %s121
      %p130 = scmp.eq.s32.totalorder %s21, 1
      %p131 = por %p129, %p130
      %p132 = scmp.ne.s32.totalorder %s121, %s122
      %p133 = scmp.eq.s32.totalorder %s21, 0
      %p134 = por %p132, %p133
      %p135 = scmp.ne.s32.totalorder %s121, %s122
      %p136 = scmp.eq.s32.totalorder %s22, 1
      %p137 = por %p135, %p136
      %p139 = scmp.ne.s32.totalorder %s122, %s138
      %p140 = scmp.eq.s32.totalorder %s22, 0
      %p141 = por %p139, %p140
      %s142 = ssub.s32 %s24, %s31
      %p143 = scmp.eq.s32.totalorder %s142, 0
      %s145 = sadd.s32 %s144, 1
      %s146 = scalar_select %p143, %s144, %s145
      %p149 = pneg %p143
      %p150 = scmp.eq.s32.totalorder %s16, 1
      %p151 = por %p149, %p150
      %p152 = scmp.ne.s32.totalorder %s144, %s147
      %p153 = scmp.eq.s32.totalorder %s16, 0
      %p154 = por %p152, %p153
      %p155 = scmp.ne.s32.totalorder %s144, %s147
      %p156 = scmp.eq.s32.totalorder %s21, 1
      %p157 = por %p155, %p156
      %p158 = scmp.ne.s32.totalorder %s147, %s148
      %p159 = scmp.eq.s32.totalorder %s21, 0
      %p160 = por %p158, %p159
      %p161 = scmp.ne.s32.totalorder %s147, %s148
      %p162 = scmp.eq.s32.totalorder %s22, 1
      %p163 = por %p161, %p162
      %p165 = scmp.ne.s32.totalorder %s148, %s164
      %p166 = scmp.eq.s32.totalorder %s22, 0
      %p167 = por %p165, %p166
      %s168 = ssub.s32 %s23, %s35
      %s169 = ssub.s32 %s24, %s31
      %s170 = sor.u32 %s168, %s169
      %p171 = scmp.eq.s32.totalorder %s170, 0
      %s173 = sadd.s32 %s172, 1
      %s174 = scalar_select %p171, %s172, %s173
      %p177 = pneg %p171
      %p178 = scmp.eq.s32.totalorder %s16, 1
      %p179 = por %p177, %p178
      %p180 = scmp.ne.s32.totalorder %s172, %s175
      %p181 = scmp.eq.s32.totalorder %s16, 0
      %p182 = por %p180, %p181
      %p183 = scmp.ne.s32.totalorder %s172, %s175
      %p184 = scmp.eq.s32.totalorder %s21, 1
      %p185 = por %p183, %p184
      %p186 = scmp.ne.s32.totalorder %s175, %s176
      %p187 = scmp.eq.s32.totalorder %s21, 0
      %p188 = por %p186, %p187
      %p189 = scmp.ne.s32.totalorder %s175, %s176
      %p190 = scmp.eq.s32.totalorder %s22, 1
      %p191 = por %p189, %p190
      %p193 = scmp.ne.s32.totalorder %s176, %s192
      %p194 = scmp.eq.s32.totalorder %s22, 0
      %p195 = por %p193, %p194
      %s196 = ssub.s32 %s23, %s35
      %s197 = ssub.s32 %s24, %s31
      %s198 = sor.u32 %s196, %s197
      %p199 = scmp.eq.s32.totalorder %s198, 0
      %s201 = sadd.s32 %s200, 1
      %s202 = scalar_select %p199, %s200, %s201
      %p205 = pneg %p199
      %p206 = scmp.eq.s32.totalorder %s16, 1
      %p207 = por %p205, %p206
      %p208 = scmp.ne.s32.totalorder %s200, %s203
      %p209 = scmp.eq.s32.totalorder %s16, 0
      %p210 = por %p208, %p209
      %p211 = scmp.ne.s32.totalorder %s200, %s203
      %p212 = scmp.eq.s32.totalorder %s21, 1
      %p213 = por %p211, %p212
      %p214 = scmp.ne.s32.totalorder %s203, %s204
      %p215 = scmp.eq.s32.totalorder %s21, 0
      %p216 = por %p214, %p215
      %p217 = scmp.ne.s32.totalorder %s203, %s204
      %p218 = scmp.eq.s32.totalorder %s22, 1
      %p219 = por %p217, %p218
      %p221 = scmp.ne.s32.totalorder %s204, %s220
      %p222 = scmp.eq.s32.totalorder %s22, 0
      %p223 = por %p221, %p222
      %p224 = scmp.le.s32.totalorder 1, %s16
      %p225 = scmp.lt.s32.totalorder %s16, 3
      %p226 = pnand %p224, %p225
      %p227 = pneg %p226
      // Predicated region
      $region9: #{mha_relb_forward.4} parent=5 // pred_check
        _
      $region10: #{mha_relb_forward.4} parent=5 // pred_check_branch
        %229 = sbr.rel (%p226) target = $region12
      $region11: #{mha_relb_forward.4} parent=5 // pred_region
        %s230 = ssub.s32 %s16, 1
        // Predicated region
        $region13: #{mha_relb_forward.4} parent=11 // pred_check
          %p231 = pneg %p134
        $region14: #{mha_relb_forward.4} parent=11 // pred_check_branch
          %233 = sbr.rel (%p231) target = $region16
        $region15: #{mha_relb_forward.4} parent=11 // pred_region
          %p234 = scmp.lt.s32.totalorder %s26, 0
          %s235 = scalar_select %p234, %s26, 0
          %s236 = smul.addr %s235, 8
          %s237 = scalar_lea.vmem %s3, %s236
        $region16: #{mha_relb_forward.4} parent=11 // pred_fallthru
          _
        // Predicated region
        $region17: #{mha_relb_forward.4} parent=11 // pred_check
          %p238 = pneg %p160
        $region18: #{mha_relb_forward.4} parent=11 // pred_check_branch
          %240 = sbr.rel (%p238) target = $region20
        $region19: #{mha_relb_forward.4} parent=11 // pred_region
          %p241 = scmp.lt.s32.totalorder %s26, 0
          %s242 = scalar_select %p241, %s26, 0
          %s243 = smul.addr %s242, 8
          %s244 = scalar_lea.vmem %s4, %s243
        $region20: #{mha_relb_forward.4} parent=11 // pred_fallthru
          _
      $region12: #{mha_relb_forward.4} parent=5 // pred_fallthru
        _
      %p245 = scmp.lt.s32.totalorder %s16, 2
      // Predicated region
      $region21: #{mha_relb_forward.4} parent=5 // pred_check
        %p246 = pneg %p245
      $region22: #{mha_relb_forward.4} parent=5 // pred_check_branch
        %248 = sbr.rel (%p246) target = $region24
      $region23: #{mha_relb_forward.4} parent=5 // pred_region
        // Predicated region
        $region25: #{mha_relb_forward.4} parent=23 // pred_check
          %p249 = pneg %p50
        $region26: #{mha_relb_forward.4} parent=23 // pred_check_branch
          %251 = sbr.rel (%p249) target = $region28
        $region27: #{mha_relb_forward.4} parent=23 // pred_region
          %p252 = scmp.lt.s32.totalorder %s23, 1
          %s253 = scalar_select %p252, %s23, 1
          %p254 = scmp.lt.s32.totalorder %s24, 0
          %s255 = scalar_select %p254, %s24, 0
          %s256 = sadd.s32 %s255, %s253
          %s257 = smul.addr %s256, 4
          %s258 = scalar_lea.vmem %s0, %s257
        $region28: #{mha_relb_forward.4} parent=23 // pred_fallthru
          _
        // Predicated region
        $region29: #{mha_relb_forward.4} parent=23 // pred_check
          %p259 = pneg %p76
        $region30: #{mha_relb_forward.4} parent=23 // pred_check_branch
          %261 = sbr.rel (%p259) target = $region32
        $region31: #{mha_relb_forward.4} parent=23 // pred_region
          %p262 = scmp.lt.s32.totalorder %s23, 1
          %s263 = scalar_select %p262, %s23, 1
          %s264 = sadd.s32 %s263, 2
          %s265 = smul.addr %s264, 4
          %s266 = scalar_lea.vmem %s1, %s265
        $region32: #{mha_relb_forward.4} parent=23 // pred_fallthru
          _
        // Predicated region
        $region33: #{mha_relb_forward.4} parent=23 // pred_check
          %p267 = pneg %p102
        $region34: #{mha_relb_forward.4} parent=23 // pred_check_branch
          %269 = sbr.rel (%p267) target = $region36
        $region35: #{mha_relb_forward.4} parent=23 // pred_region
          %p270 = scmp.lt.s32.totalorder %s23, 1
          %s271 = scalar_select %p270, %s23, 1
          %s272 = sadd.s32 %s271, 4
          %s273 = smul.addr %s272, 4
          %s274 = scalar_lea.vmem %s2, %s273
        $region36: #{mha_relb_forward.4} parent=23 // pred_fallthru
          _
      $region24: #{mha_relb_forward.4} parent=5 // pred_fallthru
        _
      %p275 = scmp.le.s32.totalorder 1, %s16
      %p276 = scmp.lt.s32.totalorder %s16, 3
      %p277 = pnand %p275, %p276
      %p278 = pneg %p277
      // Predicated region
      $region37: #{mha_relb_forward.4} parent=5 // pred_check
        _
      $region38: #{mha_relb_forward.4} parent=5 // pred_check_branch
        %280 = sbr.rel (%p277) target = $region40
      $region39: #{mha_relb_forward.4} parent=5 // pred_region
        %s281 = ssub.s32 %s16, 1
        %p282 = scmp.lt.s32.totalorder %s25, 1
        %s283 = scalar_select %p282, %s25, 1
        %p284 = scmp.lt.s32.totalorder %s26, 0
        %s285 = scalar_select %p284, %s26, 0
        %s286 = sadd.s32 %s285, %s283
        %s287 = smul.addr %s286, 4
        %s288 = scalar_lea.vmem %s0, %s287
        %p289 = pneg %p56
        %p290 = pneg %p53
        %p291 = scmp.lt.s32.totalorder %s25, 1
        %s292 = scalar_select %p291, %s25, 1
        %s293 = sadd.s32 %s292, 2
        %s294 = smul.addr %s293, 4
        %s295 = scalar_lea.vmem %s1, %s294
        %p296 = pneg %p82
        %p297 = pneg %p79
        %p298 = scmp.lt.s32.totalorder %s25, 1
        %s299 = scalar_select %p298, %s25, 1
        %s300 = sadd.s32 %s299, 4
        %s301 = smul.addr %s300, 4
        %s302 = scalar_lea.vmem %s2, %s301
        %p303 = pneg %p108
        %p304 = pneg %p105
        %p305 = scmp.lt.s32.totalorder %s26, 0
        %s306 = scalar_select %p305, %s26, 0
        %s307 = smul.addr %s306, 8
        %s308 = scalar_lea.vmem %s3, %s307
        %p309 = pneg %p134
        %p310 = pneg %p131
        %p311 = scmp.lt.s32.totalorder %s26, 0
        %s312 = scalar_select %p311, %s26, 0
        %s313 = smul.addr %s312, 8
        %s314 = scalar_lea.vmem %s4, %s313
        %p315 = pneg %p160
        %p316 = pneg %p157
        %p317 = pneg %p188
        %p318 = pneg %p185
        %p319 = scmp.lt.s32.totalorder %s25, 1
        %s320 = scalar_select %p319, %s25, 1
        %p321 = scmp.lt.s32.totalorder %s26, 0
        %s322 = scalar_select %p321, %s26, 0
        %s323 = sadd.s32 %s322, %s320
        %s324 = smul.addr %s323, 4
        %s325 = scalar_lea.vmem %s5, %s324
        %p326 = pneg %p216
        %p327 = pneg %p213
        %s328 = sand.u32 %s203, 1
        %s329 = scalar_lea.sflag [#allocation3], %s328
        %s330 = sand.u32 %s203, 1
        %s331 = smul.addr %s330, 32
        %s332 = scalar_lea.vmem [#allocation2], %s331
        %p333 = scmp.lt.s32.totalorder %s25, 1
        %s334 = scalar_select %p333, %s25, 1
        %p335 = scmp.lt.s32.totalorder %s26, 0
        %s336 = scalar_select %p335, %s26, 0
        %s337 = sadd.s32 %s336, %s334
        %s338 = smul.addr %s337, 4
        %s339 = scalar_lea.vmem %s0, %s338
        %p340 = scmp.lt.s32.totalorder %s25, 1
        %s341 = scalar_select %p340, %s25, 1
        %s342 = sadd.s32 %s341, 2
        %s343 = smul.addr %s342, 4
        %s344 = scalar_lea.vmem %s1, %s343
        %p345 = scmp.lt.s32.totalorder %s25, 1
        %s346 = scalar_select %p345, %s25, 1
        %s347 = sadd.s32 %s346, 4
        %s348 = smul.addr %s347, 4
        %s349 = scalar_lea.vmem %s2, %s348
        %p350 = scmp.lt.s32.totalorder %s26, 0
        %s351 = scalar_select %p350, %s26, 0
        %s352 = smul.addr %s351, 8
        %s353 = scalar_lea.vmem %s3, %s352
        %p354 = scmp.lt.s32.totalorder %s26, 0
        %s355 = scalar_select %p354, %s26, 0
        %s356 = smul.addr %s355, 8
        %s357 = scalar_lea.vmem %s4, %s356
        %p358 = scmp.lt.s32.totalorder %s25, 1
        %s359 = scalar_select %p358, %s25, 1
        %p360 = scmp.lt.s32.totalorder %s26, 0
        %s361 = scalar_select %p360, %s26, 0
        %s362 = sadd.s32 %s361, %s359
        %s363 = smul.addr %s362, 4
        %s364 = scalar_lea.vmem %s5, %s363
        %v366 = vld [vmem:[%s339] sm:$0xf]
        %v367 = vld [vmem:[%s344] sm:$0xf]
        %v368 = vld [vmem:[%s349] sm:$0xf]
        %v369 = vld [vmem:[%s353] sm:$0xff]
        %v370 = vld [vmem:[%s357] sm:$0xff]
        %vm371 = vcmask 64512
        %v373 = vsel %vm371, %v366, 0
        %v376 = vsel %vm371, %v367, 0
        %378 = vmatprep.subr.bf16.mxu0 0
        %379 = vmatpush1.bf16.xpose.msra.mxu0 %v376
        %380 = vmatprep.subr.bf16.mxu0 0
        %381 = vmatpush1.bf16.xpose.msra.mxu0 0
        %382 = vmatprep.subr.bf16.mxu0 0
        %383 = vmatpush1.bf16.xpose.msra.mxu0 0
        %384 = vmatprep.subr.bf16.mxu0 0
        %385 = vmatpush1.bf16.xpose.msra.mxu0 0
        %386 = vmatprep.subr.bf16.mxu0 0
        %387 = vmatpush1.bf16.xpose.msra.mxu0 0
        %388 = vmatprep.subr.bf16.mxu0 0
        %389 = vmatpush1.bf16.xpose.msra.mxu0 0
        %390 = vmatprep.subr.bf16.mxu0 0
        %391 = vmatpush1.bf16.xpose.msra.mxu0 0
        %392 = vmatprep.subr.bf16.mxu0 0
        %393 = vmatpush1.bf16.xpose.msra.mxu0 0
        %394 = vmatprep.subr.bf16.mxu0 0
        %395 = vmatpush1.bf16.xpose.msra.mxu0 0
        %396 = vmatprep.subr.bf16.mxu0 0
        %397 = vmatpush1.bf16.xpose.msra.mxu0 0
        %398 = vmatprep.subr.bf16.mxu0 0
        %399 = vmatpush1.bf16.xpose.msra.mxu0 0
        %400 = vmatprep.subr.bf16.mxu0 0
        %401 = vmatpush1.bf16.xpose.msra.mxu0 0
        %402 = vmatprep.subr.bf16.mxu0 0
        %403 = vmatpush1.bf16.xpose.msra.mxu0 0
        %404 = vmatprep.subr.bf16.mxu0 0
        %405 = vmatpush1.bf16.xpose.msra.mxu0 0
        %406 = vmatprep.subr.bf16.mxu0 0
        %407 = vmatpush1.bf16.xpose.msra.mxu0 0
        %408 = vmatprep.subr.bf16.mxu0 0
        %409 = vmatpush1.bf16.xpose.msra.mxu0 0
        %410 = vmatprep.mubr.bf16.mxu0 0
        %411 = vmatmul.mubr.bf16.gmra.mrb[0].mxu0 %v373
        %v412 = vpop.f32.mrb[0].mxu0
        %v413 = vadd.f32 0.0, %v412
        %v414 = vpop.f32.mrb[0].mxu0
        %v415 = vpop.f32.mrb[0].mxu0
        %v416 = vpop.f32.mrb[0].mxu0
        %417 = vdwg.mxu0
        %v418 = vmul.f32 %v413, 0.35355338
        %v419 = vmul.f32 %v418, %v369
        %v420 = vadd.f32 %v419, %v370
        %421 = vst.msk [vmem:[%s332] sm:$0xff] %vm371, %v420
        %v422 = vsel %vm371, %v420, -inf
        %423 = vmax.xlane.f32.xlu0 %v422
        %v424 = vpop.xlane.xlu0 %423
        %v425 = vsub.f32 %v420, %v424
        %v426 = vmul.f32 %v425, 1.442695
        %v427 = vpow.pop %v426
        %v428 = vsel %vm371, %v427, 0.0
        %429 = vadd.xlane.f32.xlu0 %v428
        %v430 = vpop.xlane.xlu0 %429
        %v431 = vrcp.pop %v430
        %v432 = vmul.f32 %v427, %v431
        %v433 = vpack.c.bf16 %v432, %v432
        %v435 = vsel %vm371, %v433, 0
        %vm437 = vcmask 1043456
        %v439 = vsel %vm437, %v368, 0
        %441 = vmatprep.subr.bf16.mxu0 0
        %442 = vmatpush1.bf16.msra.mxu0 %v439
        %443 = vmatprep.subr.bf16.mxu0 0
        %444 = vmatpush1.bf16.msra.mxu0 0
        %445 = vmatprep.subr.bf16.mxu0 0
        %446 = vmatpush1.bf16.msra.mxu0 0
        %447 = vmatprep.subr.bf16.mxu0 0
        %448 = vmatpush1.bf16.msra.mxu0 0
        %449 = vmatprep.subr.bf16.mxu0 0
        %450 = vmatpush1.bf16.msra.mxu0 0
        %451 = vmatprep.subr.bf16.mxu0 0
        %452 = vmatpush1.bf16.msra.mxu0 0
        %453 = vmatprep.subr.bf16.mxu0 0
        %454 = vmatpush1.bf16.msra.mxu0 0
        %455 = vmatprep.subr.bf16.mxu0 0
        %456 = vmatpush1.bf16.msra.mxu0 0
        %457 = vmatprep.subr.bf16.mxu0 0
        %458 = vmatpush1.bf16.msra.mxu0 0
        %459 = vmatprep.subr.bf16.mxu0 0
        %460 = vmatpush1.bf16.msra.mxu0 0
        %461 = vmatprep.subr.bf16.mxu0 0
        %462 = vmatpush1.bf16.msra.mxu0 0
        %463 = vmatprep.subr.bf16.mxu0 0
        %464 = vmatpush1.bf16.msra.mxu0 0
        %465 = vmatprep.subr.bf16.mxu0 0
        %466 = vmatpush1.bf16.msra.mxu0 0
        %467 = vmatprep.subr.bf16.mxu0 0
        %468 = vmatpush1.bf16.msra.mxu0 0
        %469 = vmatprep.subr.bf16.mxu0 0
        %470 = vmatpush1.bf16.msra.mxu0 0
        %471 = vmatprep.subr.bf16.mxu0 0
        %472 = vmatpush1.bf16.msra.mxu0 0
        %473 = vmatprep.mubr.bf16.mxu0 0
        %474 = vmatmul.mubr.bf16.gmra.mrb[0].mxu0 %v435
        %v475 = vpop.f32.mrb[0].mxu0
        %v476 = vadd.f32 0.0, %v475
        %v477 = vpop.f32.mrb[0].mxu0
        %v478 = vpop.f32.mrb[0].mxu0
        %v479 = vpop.f32.mrb[0].mxu0
        %480 = vdwg.mxu0
        %v482 = vunpack.c.l.b16 %v366
        %v483 = vpack.c.b16 %v482, %v482
        %484 = vrot.lane.b32.xlu0 %v483, 120
        %v485 = vpop.permute.xlu0 %484
        %v487 = vunpack.c.l.b16 %v367
        %v488 = vpack.c.b16 %v487, %v487
        %489 = vrot.lane.b32.xlu0 %v488, 120
        %v490 = vpop.permute.xlu0 %489
        %v492 = vsel %vm371, %v485, 0
        %v495 = vsel %vm371, %v490, 0
        %497 = vmatprep.subr.bf16.mxu0 0
        %498 = vmatpush1.bf16.xpose.msra.mxu0 %v495
        %499 = vmatprep.subr.bf16.mxu0 0
        %500 = vmatpush1.bf16.xpose.msra.mxu0 0
        %501 = vmatprep.subr.bf16.mxu0 0
        %502 = vmatpush1.bf16.xpose.msra.mxu0 0
        %503 = vmatprep.subr.bf16.mxu0 0
        %504 = vmatpush1.bf16.xpose.msra.mxu0 0
        %505 = vmatprep.subr.bf16.mxu0 0
        %506 = vmatpush1.bf16.xpose.msra.mxu0 0
        %507 = vmatprep.subr.bf16.mxu0 0
        %508 = vmatpush1.bf16.xpose.msra.mxu0 0
        %509 = vmatprep.subr.bf16.mxu0 0
        %510 = vmatpush1.bf16.xpose.msra.mxu0 0
        %511 = vmatprep.subr.bf16.mxu0 0
        %512 = vmatpush1.bf16.xpose.msra.mxu0 0
        %513 = vmatprep.subr.bf16.mxu0 0
        %514 = vmatpush1.bf16.xpose.msra.mxu0 0
        %515 = vmatprep.subr.bf16.mxu0 0
        %516 = vmatpush1.bf16.xpose.msra.mxu0 0
        %517 = vmatprep.subr.bf16.mxu0 0
        %518 = vmatpush1.bf16.xpose.msra.mxu0 0
        %519 = vmatprep.subr.bf16.mxu0 0
        %520 = vmatpush1.bf16.xpose.msra.mxu0 0
        %521 = vmatprep.subr.bf16.mxu0 0
        %522 = vmatpush1.bf16.xpose.msra.mxu0 0
        %523 = vmatprep.subr.bf16.mxu0 0
        %524 = vmatpush1.bf16.xpose.msra.mxu0 0
        %525 = vmatprep.subr.bf16.mxu0 0
        %526 = vmatpush1.bf16.xpose.msra.mxu0 0
        %527 = vmatprep.subr.bf16.mxu0 0
        %528 = vmatpush1.bf16.xpose.msra.mxu0 0
        %529 = vmatprep.mubr.bf16.mxu0 0
        %530 = vmatmul.mubr.bf16.gmra.mrb[0].mxu0 %v492
        %v531 = vpop.f32.mrb[0].mxu0
        %v532 = vadd.f32 0.0, %v531
        %v533 = vpop.f32.mrb[0].mxu0
        %v534 = vpop.f32.mrb[0].mxu0
        %v535 = vpop.f32.mrb[0].mxu0
        %536 = vdwg.mxu0
        %v537 = vmul.f32 %v532, 0.35355338
        %v538 = vmul.f32 %v537, %v369
        %v539 = vadd.f32 %v538, %v370
        %s540 = scalar_lea.vmem %s332, 8 [#allocation2]
        %541 = vst.msk [vmem:[%s540] sm:$0xff] %vm371, %v539
        %v542 = vsel %vm371, %v539, -inf
        %543 = vmax.xlane.f32.xlu0 %v542
        %v544 = vpop.xlane.xlu0 %543
        %v545 = vsub.f32 %v539, %v544
        %v546 = vmul.f32 %v545, 1.442695
        %v547 = vpow.pop %v546
        %v548 = vsel %vm371, %v547, 0.0
        %549 = vadd.xlane.f32.xlu0 %v548
        %v550 = vpop.xlane.xlu0 %549
        %v551 = vrcp.pop %v550
        %v552 = vmul.f32 %v547, %v551
        %v553 = vpack.c.bf16 %v552, %v552
        %v555 = vunpack.c.l.b16 %v368
        %v556 = vpack.c.b16 %v555, %v555
        %557 = vrot.lane.b32.xlu0 %v556, 120
        %v558 = vpop.permute.xlu0 %557
        %v560 = vsel %vm371, %v553, 0
        %v563 = vsel %vm437, %v558, 0
        %565 = vmatprep.subr.bf16.mxu0 0
        %566 = vmatpush1.bf16.msra.mxu0 %v563
        %567 = vmatprep.subr.bf16.mxu0 0
        %568 = vmatpush1.bf16.msra.mxu0 0
        %569 = vmatprep.subr.bf16.mxu0 0
        %570 = vmatpush1.bf16.msra.mxu0 0
        %571 = vmatprep.subr.bf16.mxu0 0
        %572 = vmatpush1.bf16.msra.mxu0 0
        %573 = vmatprep.subr.bf16.mxu0 0
        %574 = vmatpush1.bf16.msra.mxu0 0
        %575 = vmatprep.subr.bf16.mxu0 0
        %576 = vmatpush1.bf16.msra.mxu0 0
        %577 = vmatprep.subr.bf16.mxu0 0
        %578 = vmatpush1.bf16.msra.mxu0 0
        %579 = vmatprep.subr.bf16.mxu0 0
        %580 = vmatpush1.bf16.msra.mxu0 0
        %581 = vmatprep.subr.bf16.mxu0 0
        %582 = vmatpush1.bf16.msra.mxu0 0
        %583 = vmatprep.subr.bf16.mxu0 0
        %584 = vmatpush1.bf16.msra.mxu0 0
        %585 = vmatprep.subr.bf16.mxu0 0
        %586 = vmatpush1.bf16.msra.mxu0 0
        %587 = vmatprep.subr.bf16.mxu0 0
        %588 = vmatpush1.bf16.msra.mxu0 0
        %589 = vmatprep.subr.bf16.mxu0 0
        %590 = vmatpush1.bf16.msra.mxu0 0
        %591 = vmatprep.subr.bf16.mxu0 0
        %592 = vmatpush1.bf16.msra.mxu0 0
        %593 = vmatprep.subr.bf16.mxu0 0
        %594 = vmatpush1.bf16.msra.mxu0 0
        %595 = vmatprep.subr.bf16.mxu0 0
        %596 = vmatpush1.bf16.msra.mxu0 0
        %597 = vmatprep.mubr.bf16.mxu0 0
        %598 = vmatmul.mubr.bf16.gmra.mrb[0].mxu0 %v560
        %v599 = vpop.f32.mrb[0].mxu0
        %v600 = vadd.f32 0.0, %v599
        %v601 = vpop.f32.mrb[0].mxu0
        %v602 = vpop.f32.mrb[0].mxu0
        %v603 = vpop.f32.mrb[0].mxu0
        %604 = vdwg.mxu0
        %605 = vrot.lane.b32.xlu0 %v483, 112
        %v606 = vpop.permute.xlu0 %605
        %607 = vrot.lane.b32.xlu0 %v488, 112
        %v608 = vpop.permute.xlu0 %607
        %v610 = vsel %vm371, %v606, 0
        %v613 = vsel %vm371, %v608, 0
        %615 = vmatprep.subr.bf16.mxu0 0
        %616 = vmatpush1.bf16.xpose.msra.mxu0 %v613
        %617 = vmatprep.subr.bf16.mxu0 0
        %618 = vmatpush1.bf16.xpose.msra.mxu0 0
        %619 = vmatprep.subr.bf16.mxu0 0
        %620 = vmatpush1.bf16.xpose.msra.mxu0 0
        %621 = vmatprep.subr.bf16.mxu0 0
        %622 = vmatpush1.bf16.xpose.msra.mxu0 0
        %623 = vmatprep.subr.bf16.mxu0 0
        %624 = vmatpush1.bf16.xpose.msra.mxu0 0
        %625 = vmatprep.subr.bf16.mxu0 0
        %626 = vmatpush1.bf16.xpose.msra.mxu0 0
        %627 = vmatprep.subr.bf16.mxu0 0
        %628 = vmatpush1.bf16.xpose.msra.mxu0 0
        %629 = vmatprep.subr.bf16.mxu0 0
        %630 = vmatpush1.bf16.xpose.msra.mxu0 0
        %631 = vmatprep.subr.bf16.mxu0 0
        %632 = vmatpush1.bf16.xpose.msra.mxu0 0
        %633 = vmatprep.subr.bf16.mxu0 0
        %634 = vmatpush1.bf16.xpose.msra.mxu0 0
        %635 = vmatprep.subr.bf16.mxu0 0
        %636 = vmatpush1.bf16.xpose.msra.mxu0 0
        %637 = vmatprep.subr.bf16.mxu0 0
        %638 = vmatpush1.bf16.xpose.msra.mxu0 0
        %639 = vmatprep.subr.bf16.mxu0 0
        %640 = vmatpush1.bf16.xpose.msra.mxu0 0
        %641 = vmatprep.subr.bf16.mxu0 0
        %642 = vmatpush1.bf16.xpose.msra.mxu0 0
        %643 = vmatprep.subr.bf16.mxu0 0
        %644 = vmatpush1.bf16.xpose.msra.mxu0 0
        %645 = vmatprep.subr.bf16.mxu0 0
        %646 = vmatpush1.bf16.xpose.msra.mxu0 0
        %647 = vmatprep.mubr.bf16.mxu0 0
        %648 = vmatmul.mubr.bf16.gmra.mrb[0].mxu0 %v610
        %v649 = vpop.f32.mrb[0].mxu0
        %v650 = vadd.f32 0.0, %v649
        %v651 = vpop.f32.mrb[0].mxu0
        %v652 = vpop.f32.mrb[0].mxu0
        %v653 = vpop.f32.mrb[0].mxu0
        %654 = vdwg.mxu0
        %v655 = vmul.f32 %v650, 0.35355338
        %v656 = vmul.f32 %v655, %v369
        %v657 = vadd.f32 %v656, %v370
        %s658 = scalar_lea.vmem %s332, 16 [#allocation2]
        %659 = vst.msk [vmem:[%s658] sm:$0xff] %vm371, %v657
        %v660 = vsel %vm371, %v657, -inf
        %661 = vmax.xlane.f32.xlu0 %v660
        %v662 = vpop.xlane.xlu0 %661
        %v663 = vsub.f32 %v657, %v662
        %v664 = vmul.f32 %v663, 1.442695
        %v665 = vpow.pop %v664
        %v666 = vsel %vm371, %v665, 0.0
        %667 = vadd.xlane.f32.xlu0 %v666
        %v668 = vpop.xlane.xlu0 %667
        %v669 = vrcp.pop %v668
        %v670 = vmul.f32 %v665, %v669
        %v671 = vpack.c.bf16 %v670, %v670
        %672 = vrot.lane.b32.xlu0 %v556, 112
        %v673 = vpop.permute.xlu0 %672
        %v675 = vsel %vm371, %v671, 0
        %v678 = vsel %vm437, %v673, 0
        %680 = vmatprep.subr.bf16.mxu0 0
        %681 = vmatpush1.bf16.msra.mxu0 %v678
        %682 = vmatprep.subr.bf16.mxu0 0
        %683 = vmatpush1.bf16.msra.mxu0 0
        %684 = vmatprep.subr.bf16.mxu0 0
        %685 = vmatpush1.bf16.msra.mxu0 0
        %686 = vmatprep.subr.bf16.mxu0 0
        %687 = vmatpush1.bf16.msra.mxu0 0
        %688 = vmatprep.subr.bf16.mxu0 0
        %689 = vmatpush1.bf16.msra.mxu0 0
        %690 = vmatprep.subr.bf16.mxu0 0
        %691 = vmatpush1.bf16.msra.mxu0 0
        %692 = vmatprep.subr.bf16.mxu0 0
        %693 = vmatpush1.bf16.msra.mxu0 0
        %694 = vmatprep.subr.bf16.mxu0 0
        %695 = vmatpush1.bf16.msra.mxu0 0
        %696 = vmatprep.subr.bf16.mxu0 0
        %697 = vmatpush1.bf16.msra.mxu0 0
        %698 = vmatprep.subr.bf16.mxu0 0
        %699 = vmatpush1.bf16.msra.mxu0 0
        %700 = vmatprep.subr.bf16.mxu0 0
        %701 = vmatpush1.bf16.msra.mxu0 0
        %702 = vmatprep.subr.bf16.mxu0 0
        %703 = vmatpush1.bf16.msra.mxu0 0
        %704 = vmatprep.subr.bf16.mxu0 0
        %705 = vmatpush1.bf16.msra.mxu0 0
        %706 = vmatprep.subr.bf16.mxu0 0
        %707 = vmatpush1.bf16.msra.mxu0 0
        %708 = vmatprep.subr.bf16.mxu0 0
        %709 = vmatpush1.bf16.msra.mxu0 0
        %710 = vmatprep.subr.bf16.mxu0 0
        %711 = vmatpush1.bf16.msra.mxu0 0
        %712 = vmatprep.mubr.bf16.mxu0 0
        %713 = vmatmul.mubr.bf16.gmra.mrb[0].mxu0 %v675
        %v714 = vpop.f32.mrb[0].mxu0
        %v715 = vadd.f32 0.0, %v714
        %v716 = vpop.f32.mrb[0].mxu0
        %v717 = vpop.f32.mrb[0].mxu0
        %v718 = vpop.f32.mrb[0].mxu0
        %719 = vdwg.mxu0
        %720 = vrot.lane.b32.xlu0 %v483, 104
        %v721 = vpop.permute.xlu0 %720
        %722 = vrot.lane.b32.xlu0 %v488, 104
        %v723 = vpop.permute.xlu0 %722
        %v725 = vsel %vm371, %v721, 0
        %v728 = vsel %vm371, %v723, 0
        %730 = vmatprep.subr.bf16.mxu0 0
        %731 = vmatpush1.bf16.xpose.msra.mxu0 %v728
        %732 = vmatprep.subr.bf16.mxu0 0
        %733 = vmatpush1.bf16.xpose.msra.mxu0 0
        %734 = vmatprep.subr.bf16.mxu0 0
        %735 = vmatpush1.bf16.xpose.msra.mxu0 0
        %736 = vmatprep.subr.bf16.mxu0 0
        %737 = vmatpush1.bf16.xpose.msra.mxu0 0
        %738 = vmatprep.subr.bf16.mxu0 0
        %739 = vmatpush1.bf16.xpose.msra.mxu0 0
        %740 = vmatprep.subr.bf16.mxu0 0
        %741 = vmatpush1.bf16.xpose.msra.mxu0 0
        %742 = vmatprep.subr.bf16.mxu0 0
        %743 = vmatpush1.bf16.xpose.msra.mxu0 0
        %744 = vmatprep.subr.bf16.mxu0 0
        %745 = vmatpush1.bf16.xpose.msra.mxu0 0
        %746 = vmatprep.subr.bf16.mxu0 0
        %747 = vmatpush1.bf16.xpose.msra.mxu0 0
        %748 = vmatprep.subr.bf16.mxu0 0
        %749 = vmatpush1.bf16.xpose.msra.mxu0 0
        %750 = vmatprep.subr.bf16.mxu0 0
        %751 = vmatpush1.bf16.xpose.msra.mxu0 0
        %752 = vmatprep.subr.bf16.mxu0 0
        %753 = vmatpush1.bf16.xpose.msra.mxu0 0
        %754 = vmatprep.subr.bf16.mxu0 0
        %755 = vmatpush1.bf16.xpose.msra.mxu0 0
        %756 = vmatprep.subr.bf16.mxu0 0
        %757 = vmatpush1.bf16.xpose.msra.mxu0 0
        %758 = vmatprep.subr.bf16.mxu0 0
        %759 = vmatpush1.bf16.xpose.msra.mxu0 0
        %760 = vmatprep.subr.bf16.mxu0 0
        %761 = vmatpush1.bf16.xpose.msra.mxu0 0
        %762 = vmatprep.mubr.bf16.mxu0 0
        %763 = vmatmul.mubr.bf16.gmra.mrb[0].mxu0 %v725
        %v764 = vpop.f32.mrb[0].mxu0
        %v765 = vadd.f32 0.0, %v764
        %v766 = vpop.f32.mrb[0].mxu0
        %v767 = vpop.f32.mrb[0].mxu0
        %v768 = vpop.f32.mrb[0].mxu0
        %769 = vdwg.mxu0
        %v770 = vmul.f32 %v765, 0.35355338
        %v771 = vmul.f32 %v770, %v369
        %v772 = vadd.f32 %v771, %v370
        %s773 = scalar_lea.vmem %s332, 24 [#allocation2]
        %774 = vst.msk [vmem:[%s773] sm:$0xff] %vm371, %v772
        %v775 = vsel %vm371, %v772, -inf
        %776 = vmax.xlane.f32.xlu0 %v775
        %v777 = vpop.xlane.xlu0 %776
        %v778 = vsub.f32 %v772, %v777
        %v779 = vmul.f32 %v778, 1.442695
        %v780 = vpow.pop %v779
        %v781 = vsel %vm371, %v780, 0.0
        %782 = vadd.xlane.f32.xlu0 %v781
        %v783 = vpop.xlane.xlu0 %782
        %v784 = vrcp.pop %v783
        %v785 = vmul.f32 %v780, %v784
        %v786 = vpack.c.bf16 %v785, %v785
        %787 = vrot.lane.b32.xlu0 %v556, 104
        %v788 = vpop.permute.xlu0 %787
        %v790 = vsel %vm371, %v786, 0
        %v793 = vsel %vm437, %v788, 0
        %795 = vmatprep.subr.bf16.mxu0 0
        %796 = vmatpush1.bf16.msra.mxu0 %v793
        %797 = vmatprep.subr.bf16.mxu0 0
        %798 = vmatpush1.bf16.msra.mxu0 0
        %799 = vmatprep.subr.bf16.mxu0 0
        %800 = vmatpush1.bf16.msra.mxu0 0
        %801 = vmatprep.subr.bf16.mxu0 0
        %802 = vmatpush1.bf16.msra.mxu0 0
        %803 = vmatprep.subr.bf16.mxu0 0
        %804 = vmatpush1.bf16.msra.mxu0 0
        %805 = vmatprep.subr.bf16.mxu0 0
        %806 = vmatpush1.bf16.msra.mxu0 0
        %807 = vmatprep.subr.bf16.mxu0 0
        %808 = vmatpush1.bf16.msra.mxu0 0
        %809 = vmatprep.subr.bf16.mxu0 0
        %810 = vmatpush1.bf16.msra.mxu0 0
        %811 = vmatprep.subr.bf16.mxu0 0
        %812 = vmatpush1.bf16.msra.mxu0 0
        %813 = vmatprep.subr.bf16.mxu0 0
        %814 = vmatpush1.bf16.msra.mxu0 0
        %815 = vmatprep.subr.bf16.mxu0 0
        %816 = vmatpush1.bf16.msra.mxu0 0
        %817 = vmatprep.subr.bf16.mxu0 0
        %818 = vmatpush1.bf16.msra.mxu0 0
        %819 = vmatprep.subr.bf16.mxu0 0
        %820 = vmatpush1.bf16.msra.mxu0 0
        %821 = vmatprep.subr.bf16.mxu0 0
        %822 = vmatpush1.bf16.msra.mxu0 0
        %823 = vmatprep.subr.bf16.mxu0 0
        %824 = vmatpush1.bf16.msra.mxu0 0
        %825 = vmatprep.subr.bf16.mxu0 0
        %826 = vmatpush1.bf16.msra.mxu0 0
        %827 = vmatprep.mubr.bf16.mxu0 0
        %828 = vmatmul.mubr.bf16.gmra.mrb[0].mxu0 %v790
        %v829 = vpop.f32.mrb[0].mxu0
        %v830 = vadd.f32 0.0, %v829
        %v831 = vpop.f32.mrb[0].mxu0
        %v832 = vpop.f32.mrb[0].mxu0
        %v833 = vpop.f32.mrb[0].mxu0
        %834 = vdwg.mxu0
        %836 = vrot.lane.b32.xlu0 %v600, 8
        %v837 = vpop.permute.xlu0 %836
        %840 = vrot.lane.b32.xlu0 %v715, 16
        %v841 = vpop.permute.xlu0 %840
        %844 = vrot.lane.b32.xlu0 %v830, 24
        %v845 = vpop.permute.xlu0 %844
        %v847 = vsel %vm371, %v476, %v837
        %vm848 = vcmask 130048
        %v849 = vsel %vm848, %v847, %v841
        %vm850 = vcmask 195584
        %v851 = vsel %vm850, %v849, %v845
        %v852 = vpack.c.bf16 %v851, %v851
        %vm853 = vcmask 257024
        %854 = vst.msk [vmem:[%s364] sm:$0xf] %vm853, %v852
        %p855 = scmp.lt.s32.totalorder %s25, 1
        %s856 = scalar_select %p855, %s25, 1
        %p857 = scmp.lt.s32.totalorder %s26, 0
        %s858 = scalar_select %p857, %s26, 0
        %s859 = sadd.s32 %s858, %s856
        %s860 = smul.addr %s859, 4
        %s861 = scalar_lea.vmem %s5, %s860
        %s862 = sand.u32 %s203, 1
        %s863 = scalar_lea.sflag [#allocation3], %s862
        %s864 = sand.u32 %s203, 1
        %s865 = smul.addr %s864, 32
        %s866 = scalar_lea.vmem [#allocation2], %s865
        // Predicated region
        $region41: #{mha_relb_forward.4} parent=39 // pred_check
          %p867 = pneg %p185
        $region42: #{mha_relb_forward.4} parent=39 // pred_check_branch
          %869 = sbr.rel (%p867) target = $region44
        $region43: #{mha_relb_forward.4} parent=39 // pred_region
          _
        $region44: #{mha_relb_forward.4} parent=39 // pred_fallthru
          _
        // Predicated region
        $region45: #{mha_relb_forward.4} parent=39 // pred_check
          %p870 = pneg %p213
        $region46: #{mha_relb_forward.4} parent=39 // pred_check_branch
          %872 = sbr.rel (%p870) target = $region48
        $region47: #{mha_relb_forward.4} parent=39 // pred_region
          %s874 = ssub.s32 512, 512
          %875 = vsyncadd %s863, %s874
          %s876 = smul.addr %s25, 4
          %s877 = sadd.s32 %s26, %s876
          %s878 = smul.addr %s877, 128
          %s879 = scalar_lea.hbm %s6, %s878
          %s880 = sshll.u32 %s866, 4
          %s881 = int_to_ptr.vmem [resolvable:$true] %s880
          %886 = dma.vmem_to_hbm [thread:$0]  %s881, 512, %s879, %s863, 128, 128, 8
        $region48: #{mha_relb_forward.4} parent=39 // pred_fallthru
          _
      $region40: #{mha_relb_forward.4} parent=5 // pred_fallthru
        _
      %p887 = scmp.le.s32.totalorder 2, %s16
      // Predicated region
      $region49: #{mha_relb_forward.4} parent=5 // pred_check
        %p888 = pneg %p887
      $region50: #{mha_relb_forward.4} parent=5 // pred_check_branch
        %890 = sbr.rel (%p888) target = $region52
      $region51: #{mha_relb_forward.4} parent=5 // pred_region
        %s891 = ssub.s32 %s16, 2
        // Predicated region
        $region53: #{mha_relb_forward.4} parent=51 // pred_check
          %p892 = pneg %p191
        $region54: #{mha_relb_forward.4} parent=51 // pred_check_branch
          %894 = sbr.rel (%p892) target = $region56
        $region55: #{mha_relb_forward.4} parent=51 // pred_region
          %p895 = scmp.lt.s32.totalorder %s27, 1
          %s896 = scalar_select %p895, %s27, 1
          %p897 = scmp.lt.s32.totalorder %s28, 0
          %s898 = scalar_select %p897, %s28, 0
          %s899 = sadd.s32 %s898, %s896
          %s900 = smul.addr %s899, 4
          %s901 = scalar_lea.vmem %s5, %s900
        $region56: #{mha_relb_forward.4} parent=51 // pred_fallthru
          _
        // Predicated region
        $region57: #{mha_relb_forward.4} parent=51 // pred_check
          %p902 = pneg %p219
        $region58: #{mha_relb_forward.4} parent=51 // pred_check_branch
          %904 = sbr.rel (%p902) target = $region60
        $region59: #{mha_relb_forward.4} parent=51 // pred_region
          %s905 = sand.u32 %s204, 1
          %s906 = scalar_lea.sflag [#allocation3], %s905
          %s907 = sand.u32 %s204, 1
          %s908 = smul.addr %s907, 32
          %s909 = scalar_lea.vmem [#allocation2], %s908
          %910 = dma.done %s906, 512
        $region60: #{mha_relb_forward.4} parent=51 // pred_fallthru
          _
      $region52: #{mha_relb_forward.4} parent=5 // pred_fallthru
        _
    $region6: #{mha_relb_forward.4} parent=1 // loop_footer
      %s20 = sadd.s32 1, %s16
    $region7: #{mha_relb_forward.4} parent=1 // loop_footer_branch
      %15 = sbr.rel target = $region3
    $region8: #{mha_relb_forward.4} parent=1 // loop_exit
      _
    %911 = vsyncpa [#allocation3], 1
    %s912 = scalar_lea.sflag [#allocation3], 1
    %913 = vsyncpa %s912, 1

</llo_original>
